<compile_context>
chip_gen: v6e
topology: v6e:2x2x1
jax: 0.10.0
libtpu: 0.0.40
codegen_flags: <defaults>
</compile_context>

<pallas_src>
import functools

import jax
import jax.numpy as jnp
import numpy as np
from jax.experimental import pallas as pl
from jax.experimental.pallas import tpu as pltpu


def _round_up(x, m):
    return (x + m - 1) // m * m


# ----------------------------------------------------------------------------
# Pallas kernel: gradient-gating over edge blocks, accumulating into out_ref
# ----------------------------------------------------------------------------
def g2_kernel(conv_ref, sdiff_ref, m_ref, out_ref, *, p):
    """One (node-block i, edge-block k) grid step.

    conv_ref : [N_p, F_p] bf16   hoisted GCN conv output (grid-invariant block)
    sdiff_ref: [te,  N_p] bf16   (S_src - S_dst) edge tile, entries {-1, 0, +1}
    m_ref    : [tn,  te ] f32    mean-scatter tile (1/deg folded in)
    out_ref  : [tn,  F_p] f32    tau accumulator / output (resident across k)
    """
    k = pl.program_id(1)

    @pl.when(k == 0)
    def _():
        out_ref[...] = jnp.zeros_like(out_ref)

    # Fused gather-of-differences: (S_src - S_dst) @ conv, bf16 x bf16 -> f32.
    d = jnp.dot(sdiff_ref[...], conv_ref[...], preferred_element_type=jnp.float32)

    # |d|^p with even-p fast path (no abs, no pow -> pure VPU multiplies).
    if p == 1:
        diffs = jnp.abs(d)
    elif p == 2:
        diffs = d * d
    elif p % 2 == 0:
        diffs = (d * d) ** (p // 2)
    else:
        diffs = jnp.abs(d) ** p

    # Mean-scatter onto target-node rows (1/deg already folded into M).
    # Kept f32: inverse degrees are not exact in bf16 and this matmul is small
    # ([tn, te] x [te, F_p]) compared to the edge contraction above.
    out_ref[...] += jnp.dot(m_ref[...], diffs, preferred_element_type=jnp.float32)

    @pl.when(k == pl.num_programs(1) - 1)
    def _():
        out_ref[...] = jnp.tanh(out_ref[...])


# ----------------------------------------------------------------------------
# VMEM budgeting: size the scoped limit from actual buffers, per-generation cap
# ----------------------------------------------------------------------------
def _pick_vmem_limit(resident_bytes):
    cap = 64 * 1024 * 1024  # conservative fallback = v7x physical VMEM
    try:
        cap = int(pltpu.get_tpu_info().vmem_capacity_bytes)
    except Exception:
        pass
    want = max(resident_bytes + (8 << 20), 16 << 20)   # headroom for internals
    return int(min(want, cap * 3 // 4))                # never over-request


# ----------------------------------------------------------------------------
# Wrapper: hoisted conv + dense gating operators (glue), then the tiled kernel
# ----------------------------------------------------------------------------
def g2_forward(node_features, edge_index, w, b=None, p=2, tn=128, te=512):
    """node_features: [N, Fin] f32, edge_index: [2, E] int32, w: [Fin, Fout]."""
    del b  # GCN bias cancels exactly in x[src] - x[dst]; only tau is returned.

    n, fin = node_features.shape
    e = edge_index.shape[1]
    fout = w.shape[1]
    src, dst = edge_index[0], edge_index[1]

    # --- GCN conv, HOISTED out of the kernel (plain XLA, computed once) ------
    adj = jnp.zeros((n, n), jnp.float32).at[dst, src].add(1.0)
    adj_sl = adj + jnp.eye(n, dtype=jnp.float32)
    deg = adj_sl.sum(axis=1)
    d_inv_sqrt = jnp.where(deg > 0, 1.0 / jnp.sqrt(deg), 0.0)
    a_hat = d_inv_sqrt[:, None] * adj_sl * d_inv_sqrt[None, :]
    if fin <= fout:                       # reassociate: N^2 contraction on min width
        conv = jnp.dot(a_hat, node_features) @ w
    else:
        conv = a_hat @ jnp.dot(node_features, w)

    # --- dense gating operators (glue) ---------------------------------------
    # TODO(synk): for large graphs, replace these one-hot operators with a
    # scalar-prefetch gather/scatter kernel (O(E*Fout) instead of O(E*N*Fout)),
    # and cache them across calls when edge_index is static.
    eids = jnp.arange(e)
    s_src = jnp.zeros((e, n), jnp.float32).at[eids, src].set(1.0)
    s_dst = jnp.zeros((e, n), jnp.float32).at[eids, dst].set(1.0)
    s_diff = (s_src - s_dst).astype(jnp.bfloat16)                  # [E, N], exact
    cnt = jnp.zeros((n,), jnp.float32).at[dst].add(1.0)
    inv_deg = jnp.where(cnt > 0, 1.0 / cnt, 0.0)
    m_scatter = inv_deg[:, None] * s_dst.T                         # [N, E] f32

    # --- pad to lane-dense, tile-aligned shapes (zero padding is inert) ------
    n_p = _round_up(n, max(tn, 128))      # also lane-dense for the S_diff tile
    e_p = _round_up(e, te)
    f_p = _round_up(fout, 128)            # lane-dense output / MXU result cols

    conv_p = jnp.pad(conv, ((0, n_p - n), (0, f_p - fout))).astype(jnp.bfloat16)
    s_diff_p = jnp.pad(s_diff, ((0, e_p - e), (0, n_p - n)))
    m_p = jnp.pad(m_scatter, ((0, n_p - n), (0, e_p - e)))

    grid = (n_p // tn, e_p // te)

    # Resident VMEM estimate (default double-buffering on every operand).
    # TODO(synk): mark the grid-invariant conv BlockSpec pipeline_mode=pl.Buffered(1)
    # to drop its second buffer once validated on the target jax version.
    resident = (2 * n_p * f_p * 2        # conv bf16
                + 2 * te * n_p * 2       # S_diff edge tile bf16
                + 2 * tn * te * 4        # M tile f32
                + 2 * tn * f_p * 4)      # output tile f32
    vmem_limit = _pick_vmem_limit(resident)

    kernel = functools.partial(g2_kernel, p=p)

    tau_p = pl.pallas_call(
        kernel,
        out_shape=jax.ShapeDtypeStruct((n_p, f_p), jnp.float32),
        grid_spec=pltpu.PrefetchScalarGridSpec(
            num_scalar_prefetch=0,
            grid=grid,
            in_specs=[
                pl.BlockSpec((n_p, f_p), lambda i, k: (0, 0)),   # conv (bf16, grid-invariant)
                pl.BlockSpec((te, n_p), lambda i, k: (k, 0)),    # S_diff edge tile (bf16)
                pl.BlockSpec((tn, te), lambda i, k: (i, k)),     # mean-scatter tile (f32)
            ],
            out_specs=pl.BlockSpec((tn, f_p), lambda i, k: (i, 0)),
        ),
        compiler_params=pltpu.CompilerParams(
            dimension_semantics=("parallel", "arbitrary"),
            vmem_limit_bytes=vmem_limit,
        ),
    )(conv_p, s_diff_p, m_p)

    return tau_p[:n, :fout]


# ----------------------------------------------------------------------------
# Pure-JAX reference (mirrors the PyTorch forward semantics, bias included)
# ----------------------------------------------------------------------------
def g2_reference(node_features, edge_index, w, b, p=2):
    n = node_features.shape[0]
    src, dst = edge_index[0], edge_index[1]
    adj = jnp.zeros((n, n), jnp.float32).at[dst, src].add(1.0)
    adj_sl = adj + jnp.eye(n, dtype=jnp.float32)
    deg = adj_sl.sum(axis=1)
    d_inv_sqrt = jnp.where(deg > 0, 1.0 / jnp.sqrt(deg), 0.0)
    a_hat = d_inv_sqrt[:, None] * adj_sl * d_inv_sqrt[None, :]
    x = a_hat @ (node_features @ w) + b[None, :]

    diffs = jnp.abs(x[src] - x[dst]) ** p
    summed = jnp.zeros((n, x.shape[1]), jnp.float32).at[dst].add(diffs)
    cnt = jnp.zeros((n,), jnp.float32).at[dst].add(1.0)
    mean = jnp.where(cnt[:, None] > 0, summed / jnp.maximum(cnt[:, None], 1.0), 0.0)
    return jnp.tanh(mean)


if __name__ == "__main__":
    key = jax.random.PRNGKey(0)
    k_x, k_e, k_w, k_b = jax.random.split(key, 4)

    # Small but tile-exercising shapes: grid = (2 node blocks, 2 edge blocks).
    N, E, FIN, FOUT, P = 256, 1024, 64, 64, 2

    node_features = jax.random.normal(k_x, (N, FIN), dtype=jnp.float32)
    edge_index = jax.random.randint(k_e, (2, E), 0, N, dtype=jnp.int32)

    # deterministic "conv" parameters (GCN-style layer)
    w = jax.random.normal(k_w, (FIN, FOUT), dtype=jnp.float32) * (1.0 / jnp.sqrt(FIN))
    b = jax.random.normal(k_b, (FOUT,), dtype=jnp.float32) * 0.1

    tau = g2_forward(node_features, edge_index, w, b, p=P)
    tau = jax.block_until_ready(tau)

    ref = g2_reference(node_features, edge_index, w, b, p=P)
    # Tolerances loosened vs. the f32-only version: the edge contraction runs on
    # the bf16 MXU path (error bounded well under 1e-2 after the tanh).
    np.testing.assert_allclose(np.asarray(tau), np.asarray(ref), rtol=2e-2, atol=2e-2)

    print("KERNEL_OK")
</pallas_src>

<mosaic_0001>
module attributes {stable_mosaic.version = 11 : i64} {
  func.func @g2_kernel(%arg0: i32, %arg1: i32, %arg2: memref<256x128xbf16, #tpu.memory_space<vmem>>, %arg3: memref<512x256xbf16, #tpu.memory_space<vmem>>, %arg4: memref<128x512xf32, #tpu.memory_space<vmem>>, %arg5: memref<128x128xf32, #tpu.memory_space<vmem>>) attributes {dimension_semantics = [#tpu.dimension_semantics<parallel>, #tpu.dimension_semantics<arbitrary>], iteration_bounds = array<i64: 2, 2>, scalar_prefetch = 0 : i64, scratch_operands = 0 : i64, tpu.core_type = #tpu.core_type<tc>, window_params = [{pipeline_mode = #tpu.pipeline_mode<synchronous>, transform_indices = @transform_0, window_bounds = array<i64: 256, 128>}, {transform_indices = @transform_1, window_bounds = array<i64: 512, 256>}, {transform_indices = @transform_2, window_bounds = array<i64: 128, 512>}, {transform_indices = @transform_3, window_bounds = array<i64: 128, 128>}]} {
    %c0_i32 = arith.constant 0 : i32
    %0 = arith.cmpi eq, %arg1, %c0_i32 : i32
    %1 = arith.extui %0 : i1 to i32
    %c0_i32_0 = arith.constant 0 : i32
    %2 = arith.cmpi ne, %1, %c0_i32_0 : i32
    scf.if %2 {
      %cst_12 = arith.constant 0.000000e+00 : f32
      %15 = vector.broadcast %cst_12 : f32 to vector<128x128xf32>
      %c0_13 = arith.constant 0 : index
      %c0_14 = arith.constant 0 : index
      %16 = vector.load %arg5[%c0_13, %c0_14] : memref<128x128xf32, #tpu.memory_space<vmem>>, vector<128x128xf32>
      tpu.vector_store %arg5[%c0_13, %c0_14], %15 {strides = array<i32>} : memref<128x128xf32, #tpu.memory_space<vmem>>, vector<128x128xf32>,
    } else {
    }
    %c0 = arith.constant 0 : index
    %c0_1 = arith.constant 0 : index
    %3 = vector.load %arg3[%c0, %c0_1] : memref<512x256xbf16, #tpu.memory_space<vmem>>, vector<512x256xbf16>
    %c0_2 = arith.constant 0 : index
    %c0_3 = arith.constant 0 : index
    %4 = vector.load %arg2[%c0_2, %c0_3] : memref<256x128xbf16, #tpu.memory_space<vmem>>, vector<256x128xbf16>
    %cst = arith.constant dense<0.000000e+00> : vector<512x128xf32>
    %5 = tpu.matmul %3, %4, %cst {dimension_numbers = #tpu.dot_dimension_numbers<[1], [0], [0], [1], [0, 0, 1, 1], [], []>} : vector<512x256xbf16>, vector<256x128xbf16>, vector<512x128xf32> -> vector<512x128xf32>
    %6 = arith.mulf %5, %5 : vector<512x128xf32>
    %c0_4 = arith.constant 0 : index
    %c0_5 = arith.constant 0 : index
    %7 = vector.load %arg5[%c0_4, %c0_5] : memref<128x128xf32, #tpu.memory_space<vmem>>, vector<128x128xf32>
    %c0_6 = arith.constant 0 : index
    %c0_7 = arith.constant 0 : index
    %8 = vector.load %arg4[%c0_6, %c0_7] : memref<128x512xf32, #tpu.memory_space<vmem>>, vector<128x512xf32>
    %cst_8 = arith.constant dense<0.000000e+00> : vector<128x128xf32>
    %9 = tpu.matmul %8, %6, %cst_8 {dimension_numbers = #tpu.dot_dimension_numbers<[1], [0], [0], [1], [0, 0, 1, 1], [], []>} : vector<128x512xf32>, vector<512x128xf32>, vector<128x128xf32> -> vector<128x128xf32>
    %10 = arith.addf %7, %9 : vector<128x128xf32>
    %c0_9 = arith.constant 0 : index
    %c0_10 = arith.constant 0 : index
    %11 = vector.load %arg5[%c0_9, %c0_10] : memref<128x128xf32, #tpu.memory_space<vmem>>, vector<128x128xf32>
    tpu.vector_store %arg5[%c0_9, %c0_10], %10 {strides = array<i32>} : memref<128x128xf32, #tpu.memory_space<vmem>>, vector<128x128xf32>,
    %c1_i32 = arith.constant 1 : i32
    %12 = arith.cmpi eq, %arg1, %c1_i32 : i32
    %13 = arith.extui %12 : i1 to i32
    %c0_i32_11 = arith.constant 0 : i32
    %14 = arith.cmpi ne, %13, %c0_i32_11 : i32
    scf.if %14 {
      %c0_12 = arith.constant 0 : index
      %c0_13 = arith.constant 0 : index
      %15 = vector.load %arg5[%c0_12, %c0_13] : memref<128x128xf32, #tpu.memory_space<vmem>>, vector<128x128xf32>
      %16 = math.tanh %15 : vector<128x128xf32>
      %c0_14 = arith.constant 0 : index
      %c0_15 = arith.constant 0 : index
      %17 = vector.load %arg5[%c0_14, %c0_15] : memref<128x128xf32, #tpu.memory_space<vmem>>, vector<128x128xf32>
      tpu.vector_store %arg5[%c0_14, %c0_15], %16 {strides = array<i32>} : memref<128x128xf32, #tpu.memory_space<vmem>>, vector<128x128xf32>,
    } else {
    }
    return
  }
  func.func @transform_0(%arg0: i32, %arg1: i32) -> (i32, i32) {
    %c0_i32 = arith.constant 0 : i32
    %c0_i32_0 = arith.constant 0 : i32
    %c0_i32_1 = arith.constant 0 : i32
    return %c0_i32, %c0_i32_0 : i32, i32
  }
  func.func @transform_1(%arg0: i32, %arg1: i32) -> (i32, i32) {
    %c0_i32 = arith.constant 0 : i32
    %c0_i32_0 = arith.constant 0 : i32
    return %arg1, %c0_i32 : i32, i32
  }
  func.func @transform_2(%arg0: i32, %arg1: i32) -> (i32, i32) {
    %c0_i32 = arith.constant 0 : i32
    return %arg0, %arg1 : i32, i32
  }
  func.func @transform_3(%arg0: i32, %arg1: i32) -> (i32, i32) {
    %c0_i32 = arith.constant 0 : i32
    %c0_i32_0 = arith.constant 0 : i32
    return %arg0, %c0_i32 : i32, i32
  }
}

</mosaic_0001>

<llo_original>
// kernel: tpu_custom_call.1
$region0: #{tpu_custom_call.1}
  #allocation0 [shape = 'u32[]', space=smem, size = 0x4, offset = 0x4, fixed_abs, tag = 'smem constant byte address 0x4 - core index']
  #allocation1 [shape = 'u32[144,128]{1,0:T(1,128)}', space=vmem, size = 0x12000, scoped, tag = 'internal scratch']
  %s0 = inlined_call_operand.hbm [shape: bf16[256,128], index: 0, kind: input, shape index: {}]
  %s1 = inlined_call_operand.hbm [shape: bf16[1024,256], index: 1, kind: input, shape index: {}]
  %s2 = inlined_call_operand.hbm [shape: f32[256,1024], index: 2, kind: input, shape index: {}]
  %s3 = inlined_call_operand.hbm [shape: f32[256,128], index: 3, kind: output, shape index: {}]
  %s4 = sld [smem:[#allocation0]]
  $region65: #{tpu_custom_call.1} parent=0
    _
  %s6 = ssub.s32 1, %s4
  %s7 = scalar_select 0, %s6, %s4
  $region1: #{tpu_custom_call.1} parent=0
    #allocation2 [shape = 'u8[65536]{0}', space=vmem, size = 0x10000, scoped, tag = 'input window, operand 0, single buffered']
    #allocation3 [shape = 's32[2]{0}', space=sflag, size = 0x8, scoped, tag = 'scoped memory for tpu_custom_call.1']
    #allocation4 [shape = 's32[2]{0}', space=sflag, size = 0x8, scoped, tag = 'scoped memory for tpu_custom_call.1']
    #allocation5 [shape = 'u8[524288]{0}', space=vmem, size = 0x80000, scoped, tag = 'input window, operand 1']
    #allocation6 [shape = 's32[2]{0}', space=sflag, size = 0x8, scoped, tag = 'scoped memory for tpu_custom_call.1']
    #allocation7 [shape = 'u8[524288]{0}', space=vmem, size = 0x80000, scoped, tag = 'input window, operand 2']
    #allocation8 [shape = 'u8[131072]{0}', space=vmem, size = 0x20000, scoped, tag = 'output window, operand 0']
    %8 = vsyncpa [#allocation3], 0
    %9 = vsyncpa [#allocation6], 0
    %s10 = scalar_lea.sflag [#allocation6], 1
    %11 = vsyncpa %s10, 0
    %12 = vsyncpa [#allocation4], 0
    %s13 = scalar_lea.sflag [#allocation4], 1
    %14 = vsyncpa %s13, 0
    loop: start=0, step=1, limit=6
    $region2: #{tpu_custom_call.1} parent=1 // loop_pre_header
      _
    $region3: #{tpu_custom_call.1} parent=1 // loop_header
      %s16 = sphi 0, %s20
      %p17 = scmp.ge.s32.totalorder %s16, 6
      %s23 = sphi 0, %s35
      %s24 = sphi 0, %s31
      %s25 = sphi 0, %s23
      %s26 = sphi 0, %s24
      %s27 = sphi 0, %s25
      %s28 = sphi 0, %s26
      %s36 = sphi 0, %s36
      %s38 = sphi 0, %s36
      %s39 = sphi 0, %s38
      %s53 = sphi 0, %s39
      %s59 = sphi 0, %s61
      %s62 = sphi 0, %s59
      %s63 = sphi 0, %s62
      %s79 = sphi 0, %s63
      %s87 = sphi 0, %s89
      %s90 = sphi 0, %s87
      %s91 = sphi 0, %s90
      %s107 = sphi 0, %s91
      %s113 = sphi 0, %s115
      %s116 = sphi 0, %s113
      %s117 = sphi 0, %s116
      %s133 = sphi 0, %s117
    $region4: #{tpu_custom_call.1} parent=1 // loop_header_branch
      %19 = sbr.rel (%p17) target = $region8
    $region5: #{tpu_custom_call.1} parent=1 // loop_body
      %s21 = ssub.s32 %s16, 1
      %s22 = ssub.s32 %s16, 2
      %s29 = sadd.s32 1, %s24
      %p30 = scmp.ge.s32.totalorder %s29, 2
      %s31 = scalar_select %p30, 0, %s29
      %s32 = sadd.s32 1, %s23
      %s33 = scalar_select %p30, %s32, %s23
      %p34 = scmp.ge.s32.totalorder %s33, 2
      %s35 = scalar_select %p34, 0, %s33
      %s37 = sadd.s32 %s36, 1
      %p40 = scmp.eq.s32.totalorder %s16, 3
      %p41 = scmp.ne.s32.totalorder %s36, %s38
      %p42 = scmp.eq.s32.totalorder %s16, 0
      %p43 = por %p41, %p42
      %p44 = scmp.ne.s32.totalorder %s36, %s38
      %p45 = scmp.eq.s32.totalorder %s21, 3
      %p46 = por %p44, %p45
      %p47 = scmp.ne.s32.totalorder %s38, %s39
      %p48 = scmp.eq.s32.totalorder %s21, 0
      %p49 = por %p47, %p48
      %p50 = scmp.ne.s32.totalorder %s38, %s39
      %p51 = scmp.eq.s32.totalorder %s22, 3
      %p52 = por %p50, %p51
      %p54 = scmp.ne.s32.totalorder %s39, %s53
      %p55 = scmp.eq.s32.totalorder %s22, 0
      %p56 = por %p54, %p55
      %s57 = ssub.s32 %s24, %s31
      %p58 = scmp.eq.s32.totalorder %s57, 0
      %s60 = sadd.s32 %s59, 1
      %s61 = scalar_select %p58, %s59, %s60
      %p64 = pneg %p58
      %p65 = scmp.eq.s32.totalorder %s16, 3
      %p66 = por %p64, %p65
      %p67 = scmp.ne.s32.totalorder %s59, %s62
      %p68 = scmp.eq.s32.totalorder %s16, 0
      %p69 = por %p67, %p68
      %p70 = scmp.ne.s32.totalorder %s59, %s62
      %p71 = scmp.eq.s32.totalorder %s21, 3
      %p72 = por %p70, %p71
      %p73 = scmp.ne.s32.totalorder %s62, %s63
      %p74 = scmp.eq.s32.totalorder %s21, 0
      %p75 = por %p73, %p74
      %p76 = scmp.ne.s32.totalorder %s62, %s63
      %p77 = scmp.eq.s32.totalorder %s22, 3
      %p78 = por %p76, %p77
      %p80 = scmp.ne.s32.totalorder %s63, %s79
      %p81 = scmp.eq.s32.totalorder %s22, 0
      %p82 = por %p80, %p81
      %s83 = ssub.s32 %s23, %s35
      %s84 = ssub.s32 %s24, %s31
      %s85 = sor.u32 %s83, %s84
      %p86 = scmp.eq.s32.totalorder %s85, 0
      %s88 = sadd.s32 %s87, 1
      %s89 = scalar_select %p86, %s87, %s88
      %p92 = pneg %p86
      %p93 = scmp.eq.s32.totalorder %s16, 3
      %p94 = por %p92, %p93
      %p95 = scmp.ne.s32.totalorder %s87, %s90
      %p96 = scmp.eq.s32.totalorder %s16, 0
      %p97 = por %p95, %p96
      %p98 = scmp.ne.s32.totalorder %s87, %s90
      %p99 = scmp.eq.s32.totalorder %s21, 3
      %p100 = por %p98, %p99
      %p101 = scmp.ne.s32.totalorder %s90, %s91
      %p102 = scmp.eq.s32.totalorder %s21, 0
      %p103 = por %p101, %p102
      %p104 = scmp.ne.s32.totalorder %s90, %s91
      %p105 = scmp.eq.s32.totalorder %s22, 3
      %p106 = por %p104, %p105
      %p108 = scmp.ne.s32.totalorder %s91, %s107
      %p109 = scmp.eq.s32.totalorder %s22, 0
      %p110 = por %p108, %p109
      %s111 = ssub.s32 %s23, %s35
      %p112 = scmp.eq.s32.totalorder %s111, 0
      %s114 = sadd.s32 %s113, 1
      %s115 = scalar_select %p112, %s113, %s114
      %p118 = pneg %p112
      %p119 = scmp.eq.s32.totalorder %s16, 3
      %p120 = por %p118, %p119
      %p121 = scmp.ne.s32.totalorder %s113, %s116
      %p122 = scmp.eq.s32.totalorder %s16, 0
      %p123 = por %p121, %p122
      %p124 = scmp.ne.s32.totalorder %s113, %s116
      %p125 = scmp.eq.s32.totalorder %s21, 3
      %p126 = por %p124, %p125
      %p127 = scmp.ne.s32.totalorder %s116, %s117
      %p128 = scmp.eq.s32.totalorder %s21, 0
      %p129 = por %p127, %p128
      %p130 = scmp.ne.s32.totalorder %s116, %s117
      %p131 = scmp.eq.s32.totalorder %s22, 3
      %p132 = por %p130, %p131
      %p134 = scmp.ne.s32.totalorder %s117, %s133
      %p135 = scmp.eq.s32.totalorder %s22, 0
      %p136 = por %p134, %p135
      %p137 = scmp.le.s32.totalorder 1, %s16
      %p138 = scmp.lt.s32.totalorder %s16, 5
      %p139 = pnand %p137, %p138
      %p140 = pneg %p139
      // Predicated region
      $region9: #{tpu_custom_call.1} parent=5 // pred_check
        _
      $region10: #{tpu_custom_call.1} parent=5 // pred_check_branch
        %142 = sbr.rel (%p139) target = $region12
      $region11: #{tpu_custom_call.1} parent=5 // pred_region
        %s143 = ssub.s32 %s16, 1
        // Predicated region
        $region13: #{tpu_custom_call.1} parent=11 // pred_check
          %p144 = pneg %p49
        $region14: #{tpu_custom_call.1} parent=11 // pred_check_branch
          %146 = sbr.rel (%p144) target = $region16
        $region15: #{tpu_custom_call.1} parent=11 // pred_region
          %s148 = ssub.s32 2048, 2048
          %149 = vsyncadd [#allocation3], %s148
          %s150 = sshll.u32 [#allocation2], 4
          %s151 = int_to_ptr.vmem [resolvable:$true] %s150
          %156 = dma.hbm_to_vmem [thread:$0]  %s0, 2048, %s151, [#allocation3], 64, 64, 4
        $region16: #{tpu_custom_call.1} parent=11 // pred_fallthru
          _
      $region12: #{tpu_custom_call.1} parent=5 // pred_fallthru
        _
      %p157 = scmp.lt.s32.totalorder %s16, 4
      // Predicated region
      $region17: #{tpu_custom_call.1} parent=5 // pred_check
        %p158 = pneg %p157
      $region18: #{tpu_custom_call.1} parent=5 // pred_check_branch
        %160 = sbr.rel (%p158) target = $region20
      $region19: #{tpu_custom_call.1} parent=5 // pred_region
        // Predicated region
        $region21: #{tpu_custom_call.1} parent=19 // pred_check
          %p161 = pneg %p69
        $region22: #{tpu_custom_call.1} parent=19 // pred_check_branch
          %163 = sbr.rel (%p161) target = $region24
        $region23: #{tpu_custom_call.1} parent=19 // pred_region
          %s164 = sand.u32 %s16, 1
          %s165 = scalar_lea.sflag [#allocation6], %s164
          %s166 = sand.u32 %s59, 1
          %s167 = smul.addr %s166, 512
          %s168 = scalar_lea.vmem [#allocation5], %s167
          %s169 = smul.u32 64, %s24
          %s171 = ssub.s32 8192, 8192
          %172 = vsyncadd %s165, %s171
          %s173 = smul.addr %s169, 2
          %s174 = smul.addr %s173, 64
          %s175 = scalar_lea.hbm %s1, %s174
          %s176 = sshll.u32 %s168, 4
          %s177 = int_to_ptr.vmem [resolvable:$true] %s176
          %182 = dma.hbm_to_vmem [thread:$0]  %s175, 8192, %s177, %s165, 128, 128, 8
        $region24: #{tpu_custom_call.1} parent=19 // pred_fallthru
          _
        // Predicated region
        $region25: #{tpu_custom_call.1} parent=19 // pred_check
          %p183 = pneg %p97
        $region26: #{tpu_custom_call.1} parent=19 // pred_check_branch
          %185 = sbr.rel (%p183) target = $region28
        $region27: #{tpu_custom_call.1} parent=19 // pred_region
          %s186 = sand.u32 %s16, 1
          %s187 = scalar_lea.sflag [#allocation6], %s186
          %s188 = sand.u32 %s87, 1
          %s189 = smul.addr %s188, 512
          %s190 = scalar_lea.vmem [#allocation7], %s189
          %s191 = smul.u32 16, %s23
          %s192 = smul.u32 4, %s24
          %s194 = ssub.s32 8192, 8192
          %195 = vsyncadd %s187, %s194
          %s196 = smul.addr %s191, 8
          %s197 = sadd.s32 %s192, %s196
          %s198 = smul.addr %s197, 128
          %s199 = scalar_lea.hbm %s2, %s198
          %s200 = sshll.u32 %s190, 4
          %s201 = int_to_ptr.vmem [resolvable:$true] %s200
          %206 = dma.hbm_to_vmem [thread:$0]  %s199, 8192, %s201, %s187, 1024, 512, 32
        $region28: #{tpu_custom_call.1} parent=19 // pred_fallthru
          _
      $region20: #{tpu_custom_call.1} parent=5 // pred_fallthru
        _
      %p207 = scmp.le.s32.totalorder 1, %s16
      %p208 = scmp.lt.s32.totalorder %s16, 5
      %p209 = pnand %p207, %p208
      %p210 = pneg %p209
      // Predicated region
      $region29: #{tpu_custom_call.1} parent=5 // pred_check
        _
      $region30: #{tpu_custom_call.1} parent=5 // pred_check_branch
        %212 = sbr.rel (%p209) target = $region32
      $region31: #{tpu_custom_call.1} parent=5 // pred_region
        %s213 = ssub.s32 %s16, 1
        // Predicated region
        $region33: #{tpu_custom_call.1} parent=31 // pred_check
          %p214 = pneg %p49
        $region34: #{tpu_custom_call.1} parent=31 // pred_check_branch
          %216 = sbr.rel (%p214) target = $region36
        $region35: #{tpu_custom_call.1} parent=31 // pred_region
          %217 = dma.done [#allocation3], 2048
        $region36: #{tpu_custom_call.1} parent=31 // pred_fallthru
          _
        %s218 = sand.u32 %s21, 1
        %s219 = scalar_lea.sflag [#allocation6], %s218
        %s220 = sand.u32 %s62, 1
        %s221 = smul.addr %s220, 512
        %s222 = scalar_lea.vmem [#allocation5], %s221
        // Predicated region
        $region37: #{tpu_custom_call.1} parent=31 // pred_check
          %p223 = pneg %p75
        $region38: #{tpu_custom_call.1} parent=31 // pred_check_branch
          %225 = sbr.rel (%p223) target = $region40
        $region39: #{tpu_custom_call.1} parent=31 // pred_region
          %226 = dma.done %s219, 8192
        $region40: #{tpu_custom_call.1} parent=31 // pred_fallthru
          _
        %s227 = sand.u32 %s21, 1
        %s228 = scalar_lea.sflag [#allocation6], %s227
        %s229 = sand.u32 %s90, 1
        %s230 = smul.addr %s229, 512
        %s231 = scalar_lea.vmem [#allocation7], %s230
        // Predicated region
        $region41: #{tpu_custom_call.1} parent=31 // pred_check
          %p232 = pneg %p103
        $region42: #{tpu_custom_call.1} parent=31 // pred_check_branch
          %234 = sbr.rel (%p232) target = $region44
        $region43: #{tpu_custom_call.1} parent=31 // pred_region
          %235 = dma.done %s228, 8192
        $region44: #{tpu_custom_call.1} parent=31 // pred_fallthru
          _
        %p236 = pneg %p49
        %p237 = pneg %p46
        %s238 = sand.u32 %s21, 1
        %s239 = scalar_lea.sflag [#allocation6], %s238
        %s240 = sand.u32 %s62, 1
        %s241 = smul.addr %s240, 512
        %s242 = scalar_lea.vmem [#allocation5], %s241
        %p243 = pneg %p75
        %p244 = pneg %p72
        %s245 = sand.u32 %s21, 1
        %s246 = scalar_lea.sflag [#allocation6], %s245
        %s247 = sand.u32 %s90, 1
        %s248 = smul.addr %s247, 512
        %s249 = scalar_lea.vmem [#allocation7], %s248
        %p250 = pneg %p103
        %p251 = pneg %p100
        %p252 = pneg %p129
        %p253 = pneg %p126
        %s254 = sand.u32 %s116, 1
        %s255 = scalar_lea.sflag [#allocation4], %s254
        %s256 = sand.u32 %s116, 1
        %s257 = smul.addr %s256, 128
        %s258 = scalar_lea.vmem [#allocation8], %s257
        %s259 = smul.u32 64, %s26
        %s260 = smul.u32 16, %s25
        %s261 = smul.u32 4, %s26
        %s262 = smul.u32 16, %s25
        %p264 = scmp.eq.s32.totalorder %s26, 0
        // Predicated region
        $region45: #{tpu_custom_call.1} parent=31 // pred_check
          %p265 = pneg %p264
        $region46: #{tpu_custom_call.1} parent=31 // pred_check_branch
          %267 = sbr.rel (%p265) target = $region48
        $region47: #{tpu_custom_call.1} parent=31 // pred_region
          %268 = vst [vmem:[%s258] sm:$0xff] 0.0
          %269 = vst [vmem:[%s258 + $0x8] sm:$0xff] 0.0
          %270 = vst [vmem:[%s258 + $0x10] sm:$0xff] 0.0
          %271 = vst [vmem:[%s258 + $0x18] sm:$0xff] 0.0
          %272 = vst [vmem:[%s258 + $0x20] sm:$0xff] 0.0
          %273 = vst [vmem:[%s258 + $0x28] sm:$0xff] 0.0
          %274 = vst [vmem:[%s258 + $0x30] sm:$0xff] 0.0
          %275 = vst [vmem:[%s258 + $0x38] sm:$0xff] 0.0
          %276 = vst [vmem:[%s258 + $0x40] sm:$0xff] 0.0
          %277 = vst [vmem:[%s258 + $0x48] sm:$0xff] 0.0
          %278 = vst [vmem:[%s258 + $0x50] sm:$0xff] 0.0
          %279 = vst [vmem:[%s258 + $0x58] sm:$0xff] 0.0
          %280 = vst [vmem:[%s258 + $0x60] sm:$0xff] 0.0
          %281 = vst [vmem:[%s258 + $0x68] sm:$0xff] 0.0
          %282 = vst [vmem:[%s258 + $0x70] sm:$0xff] 0.0
          %283 = vst [vmem:[%s258 + $0x78] sm:$0xff] 0.0
        $region48: #{tpu_custom_call.1} parent=31 // pred_fallthru
          _
        %v284 = vld [vmem:[%s222] sm:$0xff]
        %v285 = vld [vmem:[%s222 + $0x8] sm:$0xff]
        %v286 = vld [vmem:[%s222 + $0x10] sm:$0xff]
        %v287 = vld [vmem:[%s222 + $0x18] sm:$0xff]
        %v288 = vld [vmem:[%s222 + $0x20] sm:$0xff]
        %v289 = vld [vmem:[%s222 + $0x28] sm:$0xff]
        %v290 = vld [vmem:[%s222 + $0x30] sm:$0xff]
        %v291 = vld [vmem:[%s222 + $0x38] sm:$0xff]
        %v292 = vld [vmem:[%s222 + $0x40] sm:$0xff]
        %v293 = vld [vmem:[%s222 + $0x48] sm:$0xff]
        %v294 = vld [vmem:[%s222 + $0x50] sm:$0xff]
        %v295 = vld [vmem:[%s222 + $0x58] sm:$0xff]
        %v296 = vld [vmem:[%s222 + $0x60] sm:$0xff]
        %v297 = vld [vmem:[%s222 + $0x68] sm:$0xff]
        %v298 = vld [vmem:[%s222 + $0x70] sm:$0xff]
        %v299 = vld [vmem:[%s222 + $0x78] sm:$0xff]
        %v300 = vld [vmem:[%s222 + $0x80] sm:$0xff]
        %v301 = vld [vmem:[%s222 + $0x88] sm:$0xff]
        %v302 = vld [vmem:[%s222 + $0x90] sm:$0xff]
        %v303 = vld [vmem:[%s222 + $0x98] sm:$0xff]
        %v304 = vld [vmem:[%s222 + $0xa0] sm:$0xff]
        %v305 = vld [vmem:[%s222 + $0xa8] sm:$0xff]
        %v306 = vld [vmem:[%s222 + $0xb0] sm:$0xff]
        %v307 = vld [vmem:[%s222 + $0xb8] sm:$0xff]
        %v308 = vld [vmem:[%s222 + $0xc0] sm:$0xff]
        %v309 = vld [vmem:[%s222 + $0xc8] sm:$0xff]
        %v310 = vld [vmem:[%s222 + $0xd0] sm:$0xff]
        %v311 = vld [vmem:[%s222 + $0xd8] sm:$0xff]
        %v312 = vld [vmem:[%s222 + $0xe0] sm:$0xff]
        %v313 = vld [vmem:[%s222 + $0xe8] sm:$0xff]
        %v314 = vld [vmem:[%s222 + $0xf0] sm:$0xff]
        %v315 = vld [vmem:[%s222 + $0xf8] sm:$0xff]
        %v316 = vld [vmem:[%s222 + $0x100] sm:$0xff]
        %v317 = vld [vmem:[%s222 + $0x108] sm:$0xff]
        %v318 = vld [vmem:[%s222 + $0x110] sm:$0xff]
        %v319 = vld [vmem:[%s222 + $0x118] sm:$0xff]
        %v320 = vld [vmem:[%s222 + $0x120] sm:$0xff]
        %v321 = vld [vmem:[%s222 + $0x128] sm:$0xff]
        %v322 = vld [vmem:[%s222 + $0x130] sm:$0xff]
        %v323 = vld [vmem:[%s222 + $0x138] sm:$0xff]
        %v324 = vld [vmem:[%s222 + $0x140] sm:$0xff]
        %v325 = vld [vmem:[%s222 + $0x148] sm:$0xff]
        %v326 = vld [vmem:[%s222 + $0x150] sm:$0xff]
        %v327 = vld [vmem:[%s222 + $0x158] sm:$0xff]
        %v328 = vld [vmem:[%s222 + $0x160] sm:$0xff]
        %v329 = vld [vmem:[%s222 + $0x168] sm:$0xff]
        %v330 = vld [vmem:[%s222 + $0x170] sm:$0xff]
        %v331 = vld [vmem:[%s222 + $0x178] sm:$0xff]
        %v332 = vld [vmem:[%s222 + $0x180] sm:$0xff]
        %v333 = vld [vmem:[%s222 + $0x188] sm:$0xff]
        %v334 = vld [vmem:[%s222 + $0x190] sm:$0xff]
        %v335 = vld [vmem:[%s222 + $0x198] sm:$0xff]
        %v336 = vld [vmem:[%s222 + $0x1a0] sm:$0xff]
        %v337 = vld [vmem:[%s222 + $0x1a8] sm:$0xff]
        %v338 = vld [vmem:[%s222 + $0x1b0] sm:$0xff]
        %v339 = vld [vmem:[%s222 + $0x1b8] sm:$0xff]
        %v340 = vld [vmem:[%s222 + $0x1c0] sm:$0xff]
        %v341 = vld [vmem:[%s222 + $0x1c8] sm:$0xff]
        %v342 = vld [vmem:[%s222 + $0x1d0] sm:$0xff]
        %v343 = vld [vmem:[%s222 + $0x1d8] sm:$0xff]
        %v344 = vld [vmem:[%s222 + $0x1e0] sm:$0xff]
        %v345 = vld [vmem:[%s222 + $0x1e8] sm:$0xff]
        %v346 = vld [vmem:[%s222 + $0x1f0] sm:$0xff]
        %v347 = vld [vmem:[%s222 + $0x1f8] sm:$0xff]
        %v348 = vld [vmem:[#allocation2] sm:$0xf]
        %v349 = vld [vmem:[#allocation2 + $0x4] sm:$0xf]
        %v350 = vld [vmem:[#allocation2 + $0x8] sm:$0xf]
        %v351 = vld [vmem:[#allocation2 + $0xc] sm:$0xf]
        %v352 = vld [vmem:[#allocation2 + $0x10] sm:$0xf]
        %v353 = vld [vmem:[#allocation2 + $0x14] sm:$0xf]
        %v354 = vld [vmem:[#allocation2 + $0x18] sm:$0xf]
        %v355 = vld [vmem:[#allocation2 + $0x1c] sm:$0xf]
        %v356 = vld [vmem:[#allocation2 + $0x20] sm:$0xf]
        %v357 = vld [vmem:[#allocation2 + $0x24] sm:$0xf]
        %v358 = vld [vmem:[#allocation2 + $0x28] sm:$0xf]
        %v359 = vld [vmem:[#allocation2 + $0x2c] sm:$0xf]
        %v360 = vld [vmem:[#allocation2 + $0x30] sm:$0xf]
        %v361 = vld [vmem:[#allocation2 + $0x34] sm:$0xf]
        %v362 = vld [vmem:[#allocation2 + $0x38] sm:$0xf]
        %v363 = vld [vmem:[#allocation2 + $0x3c] sm:$0xf]
        %v364 = vld [vmem:[#allocation2 + $0x40] sm:$0xf]
        %v365 = vld [vmem:[#allocation2 + $0x44] sm:$0xf]
        %v366 = vld [vmem:[#allocation2 + $0x48] sm:$0xf]
        %v367 = vld [vmem:[#allocation2 + $0x4c] sm:$0xf]
        %v368 = vld [vmem:[#allocation2 + $0x50] sm:$0xf]
        %v369 = vld [vmem:[#allocation2 + $0x54] sm:$0xf]
        %v370 = vld [vmem:[#allocation2 + $0x58] sm:$0xf]
        %v371 = vld [vmem:[#allocation2 + $0x5c] sm:$0xf]
        %v372 = vld [vmem:[#allocation2 + $0x60] sm:$0xf]
        %v373 = vld [vmem:[#allocation2 + $0x64] sm:$0xf]
        %v374 = vld [vmem:[#allocation2 + $0x68] sm:$0xf]
        %v375 = vld [vmem:[#allocation2 + $0x6c] sm:$0xf]
        %v376 = vld [vmem:[#allocation2 + $0x70] sm:$0xf]
        %v377 = vld [vmem:[#allocation2 + $0x74] sm:$0xf]
        %v378 = vld [vmem:[#allocation2 + $0x78] sm:$0xf]
        %v379 = vld [vmem:[#allocation2 + $0x7c] sm:$0xf]
        %v444 = vunpack.c.l.b16 %v284
        %v445 = vunpack.c.h.b16 %v284
        %v446 = vunpack.c.l.b16 %v285
        %v447 = vunpack.c.h.b16 %v285
        %v448 = vunpack.c.l.b16 %v286
        %v449 = vunpack.c.h.b16 %v286
        %v450 = vunpack.c.l.b16 %v287
        %v451 = vunpack.c.h.b16 %v287
        %v452 = vunpack.c.l.b16 %v288
        %v453 = vunpack.c.h.b16 %v288
        %v454 = vunpack.c.l.b16 %v289
        %v455 = vunpack.c.h.b16 %v289
        %v456 = vunpack.c.l.b16 %v290
        %v457 = vunpack.c.h.b16 %v290
        %v458 = vunpack.c.l.b16 %v291
        %v459 = vunpack.c.h.b16 %v291
        %v460 = vunpack.c.l.b16 %v292
        %v461 = vunpack.c.h.b16 %v292
        %v462 = vunpack.c.l.b16 %v293
        %v463 = vunpack.c.h.b16 %v293
        %v464 = vunpack.c.l.b16 %v294
        %v465 = vunpack.c.h.b16 %v294
        %v466 = vunpack.c.l.b16 %v295
        %v467 = vunpack.c.h.b16 %v295
        %v468 = vunpack.c.l.b16 %v296
        %v469 = vunpack.c.h.b16 %v296
        %v470 = vunpack.c.l.b16 %v297
        %v471 = vunpack.c.h.b16 %v297
        %v472 = vunpack.c.l.b16 %v298
        %v473 = vunpack.c.h.b16 %v298
        %v474 = vunpack.c.l.b16 %v299
        %v475 = vunpack.c.h.b16 %v299
        %v476 = vunpack.c.l.b16 %v300
        %v477 = vunpack.c.h.b16 %v300
        %v478 = vunpack.c.l.b16 %v301
        %v479 = vunpack.c.h.b16 %v301
        %v480 = vunpack.c.l.b16 %v302
        %v481 = vunpack.c.h.b16 %v302
        %v482 = vunpack.c.l.b16 %v303
        %v483 = vunpack.c.h.b16 %v303
        %v484 = vunpack.c.l.b16 %v304
        %v485 = vunpack.c.h.b16 %v304
        %v486 = vunpack.c.l.b16 %v305
        %v487 = vunpack.c.h.b16 %v305
        %v488 = vunpack.c.l.b16 %v306
        %v489 = vunpack.c.h.b16 %v306
        %v490 = vunpack.c.l.b16 %v307
        %v491 = vunpack.c.h.b16 %v307
        %v492 = vunpack.c.l.b16 %v308
        %v493 = vunpack.c.h.b16 %v308
        %v494 = vunpack.c.l.b16 %v309
        %v495 = vunpack.c.h.b16 %v309
        %v496 = vunpack.c.l.b16 %v310
        %v497 = vunpack.c.h.b16 %v310
        %v498 = vunpack.c.l.b16 %v311
        %v499 = vunpack.c.h.b16 %v311
        %v500 = vunpack.c.l.b16 %v312
        %v501 = vunpack.c.h.b16 %v312
        %v502 = vunpack.c.l.b16 %v313
        %v503 = vunpack.c.h.b16 %v313
        %v504 = vunpack.c.l.b16 %v314
        %v505 = vunpack.c.h.b16 %v314
        %v506 = vunpack.c.l.b16 %v315
        %v507 = vunpack.c.h.b16 %v315
        %v508 = vunpack.c.l.b16 %v316
        %v509 = vunpack.c.h.b16 %v316
        %v510 = vunpack.c.l.b16 %v317
        %v511 = vunpack.c.h.b16 %v317
        %v512 = vunpack.c.l.b16 %v318
        %v513 = vunpack.c.h.b16 %v318
        %v514 = vunpack.c.l.b16 %v319
        %v515 = vunpack.c.h.b16 %v319
        %v516 = vunpack.c.l.b16 %v320
        %v517 = vunpack.c.h.b16 %v320
        %v518 = vunpack.c.l.b16 %v321
        %v519 = vunpack.c.h.b16 %v321
        %v520 = vunpack.c.l.b16 %v322
        %v521 = vunpack.c.h.b16 %v322
        %v522 = vunpack.c.l.b16 %v323
        %v523 = vunpack.c.h.b16 %v323
        %v524 = vunpack.c.l.b16 %v324
        %v525 = vunpack.c.h.b16 %v324
        %v526 = vunpack.c.l.b16 %v325
        %v527 = vunpack.c.h.b16 %v325
        %v528 = vunpack.c.l.b16 %v326
        %v529 = vunpack.c.h.b16 %v326
        %v530 = vunpack.c.l.b16 %v327
        %v531 = vunpack.c.h.b16 %v327
        %v532 = vunpack.c.l.b16 %v328
        %v533 = vunpack.c.h.b16 %v328
        %v534 = vunpack.c.l.b16 %v329
        %v535 = vunpack.c.h.b16 %v329
        %v536 = vunpack.c.l.b16 %v330
        %v537 = vunpack.c.h.b16 %v330
        %v538 = vunpack.c.l.b16 %v331
        %v539 = vunpack.c.h.b16 %v331
        %v540 = vunpack.c.l.b16 %v332
        %v541 = vunpack.c.h.b16 %v332
        %v542 = vunpack.c.l.b16 %v333
        %v543 = vunpack.c.h.b16 %v333
        %v544 = vunpack.c.l.b16 %v334
        %v545 = vunpack.c.h.b16 %v334
        %v546 = vunpack.c.l.b16 %v335
        %v547 = vunpack.c.h.b16 %v335
        %v548 = vunpack.c.l.b16 %v336
        %v549 = vunpack.c.h.b16 %v336
        %v550 = vunpack.c.l.b16 %v337
        %v551 = vunpack.c.h.b16 %v337
        %v552 = vunpack.c.l.b16 %v338
        %v553 = vunpack.c.h.b16 %v338
        %v554 = vunpack.c.l.b16 %v339
        %v555 = vunpack.c.h.b16 %v339
        %v556 = vunpack.c.l.b16 %v340
        %v557 = vunpack.c.h.b16 %v340
        %v558 = vunpack.c.l.b16 %v341
        %v559 = vunpack.c.h.b16 %v341
        %v560 = vunpack.c.l.b16 %v342
        %v561 = vunpack.c.h.b16 %v342
        %v562 = vunpack.c.l.b16 %v343
        %v563 = vunpack.c.h.b16 %v343
        %v564 = vunpack.c.l.b16 %v344
        %v565 = vunpack.c.h.b16 %v344
        %v566 = vunpack.c.l.b16 %v345
        %v567 = vunpack.c.h.b16 %v345
        %v568 = vunpack.c.l.b16 %v346
        %v569 = vunpack.c.h.b16 %v346
        %v570 = vunpack.c.l.b16 %v347
        %v571 = vunpack.c.h.b16 %v347
        %v572 = vpack.c.b16 %v446, %v444
        %v573 = vpack.c.b16 %v447, %v445
        %v574 = vpack.c.b16 %v450, %v448
        %v575 = vpack.c.b16 %v451, %v449
        %v576 = vpack.c.b16 %v454, %v452
        %v577 = vpack.c.b16 %v455, %v453
        %v578 = vpack.c.b16 %v458, %v456
        %v579 = vpack.c.b16 %v459, %v457
        %v580 = vpack.c.b16 %v462, %v460
        %v581 = vpack.c.b16 %v463, %v461
        %v582 = vpack.c.b16 %v466, %v464
        %v583 = vpack.c.b16 %v467, %v465
        %v584 = vpack.c.b16 %v470, %v468
        %v585 = vpack.c.b16 %v471, %v469
        %v586 = vpack.c.b16 %v474, %v472
        %v587 = vpack.c.b16 %v475, %v473
        %v588 = vpack.c.b16 %v478, %v476
        %v589 = vpack.c.b16 %v479, %v477
        %v590 = vpack.c.b16 %v482, %v480
        %v591 = vpack.c.b16 %v483, %v481
        %v592 = vpack.c.b16 %v486, %v484
        %v593 = vpack.c.b16 %v487, %v485
        %v594 = vpack.c.b16 %v490, %v488
        %v595 = vpack.c.b16 %v491, %v489
        %v596 = vpack.c.b16 %v494, %v492
        %v597 = vpack.c.b16 %v495, %v493
        %v598 = vpack.c.b16 %v498, %v496
        %v599 = vpack.c.b16 %v499, %v497
        %v600 = vpack.c.b16 %v502, %v500
        %v601 = vpack.c.b16 %v503, %v501
        %v602 = vpack.c.b16 %v506, %v504
        %v603 = vpack.c.b16 %v507, %v505
        %v604 = vpack.c.b16 %v510, %v508
        %v605 = vpack.c.b16 %v511, %v509
        %v606 = vpack.c.b16 %v514, %v512
        %v607 = vpack.c.b16 %v515, %v513
        %v608 = vpack.c.b16 %v518, %v516
        %v609 = vpack.c.b16 %v519, %v517
        %v610 = vpack.c.b16 %v522, %v520
        %v611 = vpack.c.b16 %v523, %v521
        %v612 = vpack.c.b16 %v526, %v524
        %v613 = vpack.c.b16 %v527, %v525
        %v614 = vpack.c.b16 %v530, %v528
        %v615 = vpack.c.b16 %v531, %v529
        %v616 = vpack.c.b16 %v534, %v532
        %v617 = vpack.c.b16 %v535, %v533
        %v618 = vpack.c.b16 %v538, %v536
        %v619 = vpack.c.b16 %v539, %v537
        %v620 = vpack.c.b16 %v542, %v540
        %v621 = vpack.c.b16 %v543, %v541
        %v622 = vpack.c.b16 %v546, %v544
        %v623 = vpack.c.b16 %v547, %v545
        %v624 = vpack.c.b16 %v550, %v548
        %v625 = vpack.c.b16 %v551, %v549
        %v626 = vpack.c.b16 %v554, %v552
        %v627 = vpack.c.b16 %v555, %v553
        %v628 = vpack.c.b16 %v558, %v556
        %v629 = vpack.c.b16 %v559, %v557
        %v630 = vpack.c.b16 %v562, %v560
        %v631 = vpack.c.b16 %v563, %v561
        %v632 = vpack.c.b16 %v566, %v564
        %v633 = vpack.c.b16 %v567, %v565
        %v634 = vpack.c.b16 %v570, %v568
        %v635 = vpack.c.b16 %v571, %v569
        %v732 = vunpack.c.l.b16 %v348
        %v733 = vunpack.c.l.b16 %v349
        %v734 = vunpack.c.l.b16 %v350
        %v735 = vunpack.c.l.b16 %v351
        %v736 = vunpack.c.l.b16 %v352
        %v737 = vunpack.c.l.b16 %v353
        %v738 = vunpack.c.l.b16 %v354
        %v739 = vunpack.c.l.b16 %v355
        %v740 = vunpack.c.l.b16 %v356
        %v741 = vunpack.c.l.b16 %v357
        %v742 = vunpack.c.l.b16 %v358
        %v743 = vunpack.c.l.b16 %v359
        %v744 = vunpack.c.l.b16 %v360
        %v745 = vunpack.c.l.b16 %v361
        %v746 = vunpack.c.l.b16 %v362
        %v747 = vunpack.c.l.b16 %v363
        %v748 = vunpack.c.l.b16 %v364
        %v749 = vunpack.c.l.b16 %v365
        %v750 = vunpack.c.l.b16 %v366
        %v751 = vunpack.c.l.b16 %v367
        %v752 = vunpack.c.l.b16 %v368
        %v753 = vunpack.c.l.b16 %v369
        %v754 = vunpack.c.l.b16 %v370
        %v755 = vunpack.c.l.b16 %v371
        %v756 = vunpack.c.l.b16 %v372
        %v757 = vunpack.c.l.b16 %v373
        %v758 = vunpack.c.l.b16 %v374
        %v759 = vunpack.c.l.b16 %v375
        %v760 = vunpack.c.l.b16 %v376
        %v761 = vunpack.c.l.b16 %v377
        %v762 = vunpack.c.l.b16 %v378
        %v763 = vunpack.c.l.b16 %v379
        %v764 = vpack.c.b16 %v733, %v732
        %v765 = vpack.c.b16 %v735, %v734
        %v766 = vpack.c.b16 %v737, %v736
        %v767 = vpack.c.b16 %v739, %v738
        %v768 = vpack.c.b16 %v741, %v740
        %v769 = vpack.c.b16 %v743, %v742
        %v770 = vpack.c.b16 %v745, %v744
        %v771 = vpack.c.b16 %v747, %v746
        %v772 = vpack.c.b16 %v749, %v748
        %v773 = vpack.c.b16 %v751, %v750
        %v774 = vpack.c.b16 %v753, %v752
        %v775 = vpack.c.b16 %v755, %v754
        %v776 = vpack.c.b16 %v757, %v756
        %v777 = vpack.c.b16 %v759, %v758
        %v778 = vpack.c.b16 %v761, %v760
        %v779 = vpack.c.b16 %v763, %v762
        %796 = vmatprep.subr.bf16.mxu0 0
        %797 = vmatpush1.bf16.msra.mxu0 %v771
        %798 = vmatprep.subr.bf16.mxu0 0
        %799 = vmatpush1.bf16.msra.mxu0 %v770
        %800 = vmatprep.subr.bf16.mxu0 0
        %801 = vmatpush1.bf16.msra.mxu0 %v769
        %802 = vmatprep.subr.bf16.mxu0 0
        %803 = vmatpush1.bf16.msra.mxu0 %v768
        %804 = vmatprep.subr.bf16.mxu0 0
        %805 = vmatpush1.bf16.msra.mxu0 %v767
        %806 = vmatprep.subr.bf16.mxu0 0
        %807 = vmatpush1.bf16.msra.mxu0 %v766
        %808 = vmatprep.subr.bf16.mxu0 0
        %809 = vmatpush1.bf16.msra.mxu0 %v765
        %810 = vmatprep.subr.bf16.mxu0 0
        %811 = vmatpush1.bf16.msra.mxu0 %v764
        %812 = vmatprep.subr.bf16.mxu0 0
        %813 = vmatpush2.bf16.msra.mxu0 %v779
        %814 = vmatprep.subr.bf16.mxu0 0
        %815 = vmatpush2.bf16.msra.mxu0 %v778
        %816 = vmatprep.subr.bf16.mxu0 0
        %817 = vmatpush2.bf16.msra.mxu0 %v777
        %818 = vmatprep.subr.bf16.mxu0 0
        %819 = vmatpush2.bf16.msra.mxu0 %v776
        %820 = vmatprep.subr.bf16.mxu0 0
        %821 = vmatpush2.bf16.msra.mxu0 %v775
        %822 = vmatprep.subr.bf16.mxu0 0
        %823 = vmatpush2.bf16.msra.mxu0 %v774
        %824 = vmatprep.subr.bf16.mxu0 0
        %825 = vmatpush2.bf16.msra.mxu0 %v773
        %826 = vmatprep.subr.bf16.mxu0 0
        %827 = vmatpush2.bf16.msra.mxu0 %v772
        %828 = vmatprep.mubr.bf16.mxu0 %v573
        %829 = vmatmul.mubr.bf16.gmra.mxu0 %v572
        %v830 = vpop.f32.mrf.mxu0
        %v831 = vadd.f32 0.0, %v830
        %v832 = vpop.f32.mrf.mxu0
        %v833 = vpop.f32.mrf.mxu0
        %v834 = vadd.f32 0.0, %v833
        %v835 = vpop.f32.mrf.mxu0
        %836 = vmatprep.mubr.bf16.mxu0 %v575
        %837 = vmatmul.mubr.bf16.gmra.mxu0 %v574
        %v838 = vpop.f32.mrf.mxu0
        %v839 = vadd.f32 0.0, %v838
        %v840 = vpop.f32.mrf.mxu0
        %v841 = vpop.f32.mrf.mxu0
        %v842 = vadd.f32 0.0, %v841
        %v843 = vpop.f32.mrf.mxu0
        %844 = vmatprep.mubr.bf16.mxu0 %v577
        %845 = vmatmul.mubr.bf16.gmra.mxu0 %v576
        %v846 = vpop.f32.mrf.mxu0
        %v847 = vadd.f32 0.0, %v846
        %v848 = vpop.f32.mrf.mxu0
        %v849 = vpop.f32.mrf.mxu0
        %v850 = vadd.f32 0.0, %v849
        %v851 = vpop.f32.mrf.mxu0
        %852 = vmatprep.mubr.bf16.mxu0 %v579
        %853 = vmatmul.mubr.bf16.gmra.mxu0 %v578
        %v854 = vpop.f32.mrf.mxu0
        %v855 = vadd.f32 0.0, %v854
        %v856 = vpop.f32.mrf.mxu0
        %v857 = vpop.f32.mrf.mxu0
        %v858 = vadd.f32 0.0, %v857
        %v859 = vpop.f32.mrf.mxu0
        %860 = vmatprep.mubr.bf16.mxu0 %v581
        %861 = vmatmul.mubr.bf16.gmra.mxu0 %v580
        %v862 = vpop.f32.mrf.mxu0
        %v863 = vadd.f32 0.0, %v862
        %v864 = vpop.f32.mrf.mxu0
        %v865 = vpop.f32.mrf.mxu0
        %v866 = vadd.f32 0.0, %v865
        %v867 = vpop.f32.mrf.mxu0
        %868 = vmatprep.mubr.bf16.mxu0 %v583
        %869 = vmatmul.mubr.bf16.gmra.mxu0 %v582
        %v870 = vpop.f32.mrf.mxu0
        %v871 = vadd.f32 0.0, %v870
        %v872 = vpop.f32.mrf.mxu0
        %v873 = vpop.f32.mrf.mxu0
        %v874 = vadd.f32 0.0, %v873
        %v875 = vpop.f32.mrf.mxu0
        %876 = vmatprep.mubr.bf16.mxu0 %v585
        %877 = vmatmul.mubr.bf16.gmra.mxu0 %v584
        %v878 = vpop.f32.mrf.mxu0
        %v879 = vadd.f32 0.0, %v878
        %v880 = vpop.f32.mrf.mxu0
        %v881 = vpop.f32.mrf.mxu0
        %v882 = vadd.f32 0.0, %v881
        %v883 = vpop.f32.mrf.mxu0
        %884 = vmatprep.mubr.bf16.mxu0 %v587
        %885 = vmatmul.mubr.bf16.gmra.mxu0 %v586
        %v886 = vpop.f32.mrf.mxu0
        %v887 = vadd.f32 0.0, %v886
        %v888 = vpop.f32.mrf.mxu0
        %v889 = vpop.f32.mrf.mxu0
        %v890 = vadd.f32 0.0, %v889
        %v891 = vpop.f32.mrf.mxu0
        %892 = vmatprep.mubr.bf16.mxu0 %v589
        %893 = vmatmul.mubr.bf16.gmra.mxu0 %v588
        %v894 = vpop.f32.mrf.mxu0
        %v895 = vadd.f32 0.0, %v894
        %v896 = vpop.f32.mrf.mxu0
        %v897 = vpop.f32.mrf.mxu0
        %v898 = vadd.f32 0.0, %v897
        %v899 = vpop.f32.mrf.mxu0
        %900 = vmatprep.mubr.bf16.mxu0 %v591
        %901 = vmatmul.mubr.bf16.gmra.mxu0 %v590
        %v902 = vpop.f32.mrf.mxu0
        %v903 = vadd.f32 0.0, %v902
        %v904 = vpop.f32.mrf.mxu0
        %v905 = vpop.f32.mrf.mxu0
        %v906 = vadd.f32 0.0, %v905
        %v907 = vpop.f32.mrf.mxu0
        %908 = vmatprep.mubr.bf16.mxu0 %v593
        %909 = vmatmul.mubr.bf16.gmra.mxu0 %v592
        %v910 = vpop.f32.mrf.mxu0
        %v911 = vadd.f32 0.0, %v910
        %v912 = vpop.f32.mrf.mxu0
        %v913 = vpop.f32.mrf.mxu0
        %v914 = vadd.f32 0.0, %v913
        %v915 = vpop.f32.mrf.mxu0
        %916 = vmatprep.mubr.bf16.mxu0 %v595
        %917 = vmatmul.mubr.bf16.gmra.mxu0 %v594
        %v918 = vpop.f32.mrf.mxu0
        %v919 = vadd.f32 0.0, %v918
        %v920 = vpop.f32.mrf.mxu0
        %v921 = vpop.f32.mrf.mxu0
        %v922 = vadd.f32 0.0, %v921
        %v923 = vpop.f32.mrf.mxu0
        %924 = vmatprep.mubr.bf16.mxu0 %v597
        %925 = vmatmul.mubr.bf16.gmra.mxu0 %v596
        %v926 = vpop.f32.mrf.mxu0
        %v927 = vadd.f32 0.0, %v926
        %v928 = vpop.f32.mrf.mxu0
        %v929 = vpop.f32.mrf.mxu0
        %v930 = vadd.f32 0.0, %v929
        %v931 = vpop.f32.mrf.mxu0
        %932 = vmatprep.mubr.bf16.mxu0 %v599
        %933 = vmatmul.mubr.bf16.gmra.mxu0 %v598
        %v934 = vpop.f32.mrf.mxu0
        %v935 = vadd.f32 0.0, %v934
        %v936 = vpop.f32.mrf.mxu0
        %v937 = vpop.f32.mrf.mxu0
        %v938 = vadd.f32 0.0, %v937
        %v939 = vpop.f32.mrf.mxu0
        %940 = vmatprep.mubr.bf16.mxu0 %v601
        %941 = vmatmul.mubr.bf16.gmra.mxu0 %v600
        %v942 = vpop.f32.mrf.mxu0
        %v943 = vadd.f32 0.0, %v942
        %v944 = vpop.f32.mrf.mxu0
        %v945 = vpop.f32.mrf.mxu0
        %v946 = vadd.f32 0.0, %v945
        %v947 = vpop.f32.mrf.mxu0
        %948 = vmatprep.mubr.bf16.mxu0 %v603
        %949 = vmatmul.mubr.bf16.gmra.mxu0 %v602
        %v950 = vpop.f32.mrf.mxu0
        %v951 = vadd.f32 0.0, %v950
        %v952 = vpop.f32.mrf.mxu0
        %v953 = vpop.f32.mrf.mxu0
        %v954 = vadd.f32 0.0, %v953
        %v955 = vpop.f32.mrf.mxu0
        %956 = vmatprep.mubr.bf16.mxu0 %v605
        %957 = vmatmul.mubr.bf16.gmra.mxu0 %v604
        %v958 = vpop.f32.mrf.mxu0
        %v959 = vadd.f32 0.0, %v958
        %v960 = vpop.f32.mrf.mxu0
        %v961 = vpop.f32.mrf.mxu0
        %v962 = vadd.f32 0.0, %v961
        %v963 = vpop.f32.mrf.mxu0
        %964 = vmatprep.mubr.bf16.mxu0 %v607
        %965 = vmatmul.mubr.bf16.gmra.mxu0 %v606
        %v966 = vpop.f32.mrf.mxu0
        %v967 = vadd.f32 0.0, %v966
        %v968 = vpop.f32.mrf.mxu0
        %v969 = vpop.f32.mrf.mxu0
        %v970 = vadd.f32 0.0, %v969
        %v971 = vpop.f32.mrf.mxu0
        %972 = vmatprep.mubr.bf16.mxu0 %v609
        %973 = vmatmul.mubr.bf16.gmra.mxu0 %v608
        %v974 = vpop.f32.mrf.mxu0
        %v975 = vadd.f32 0.0, %v974
        %v976 = vpop.f32.mrf.mxu0
        %v977 = vpop.f32.mrf.mxu0
        %v978 = vadd.f32 0.0, %v977
        %v979 = vpop.f32.mrf.mxu0
        %980 = vmatprep.mubr.bf16.mxu0 %v611
        %981 = vmatmul.mubr.bf16.gmra.mxu0 %v610
        %v982 = vpop.f32.mrf.mxu0
        %v983 = vadd.f32 0.0, %v982
        %v984 = vpop.f32.mrf.mxu0
        %v985 = vpop.f32.mrf.mxu0
        %v986 = vadd.f32 0.0, %v985
        %v987 = vpop.f32.mrf.mxu0
        %988 = vmatprep.mubr.bf16.mxu0 %v613
        %989 = vmatmul.mubr.bf16.gmra.mxu0 %v612
        %v990 = vpop.f32.mrf.mxu0
        %v991 = vadd.f32 0.0, %v990
        %v992 = vpop.f32.mrf.mxu0
        %v993 = vpop.f32.mrf.mxu0
        %v994 = vadd.f32 0.0, %v993
        %v995 = vpop.f32.mrf.mxu0
        %996 = vmatprep.mubr.bf16.mxu0 %v615
        %997 = vmatmul.mubr.bf16.gmra.mxu0 %v614
        %v998 = vpop.f32.mrf.mxu0
        %v999 = vadd.f32 0.0, %v998
        %v1000 = vpop.f32.mrf.mxu0
        %v1001 = vpop.f32.mrf.mxu0
        %v1002 = vadd.f32 0.0, %v1001
        %v1003 = vpop.f32.mrf.mxu0
        %1004 = vmatprep.mubr.bf16.mxu0 %v617
        %1005 = vmatmul.mubr.bf16.gmra.mxu0 %v616
        %v1006 = vpop.f32.mrf.mxu0
        %v1007 = vadd.f32 0.0, %v1006
        %v1008 = vpop.f32.mrf.mxu0
        %v1009 = vpop.f32.mrf.mxu0
        %v1010 = vadd.f32 0.0, %v1009
        %v1011 = vpop.f32.mrf.mxu0
        %1012 = vmatprep.mubr.bf16.mxu0 %v619
        %1013 = vmatmul.mubr.bf16.gmra.mxu0 %v618
        %v1014 = vpop.f32.mrf.mxu0
        %v1015 = vadd.f32 0.0, %v1014
        %v1016 = vpop.f32.mrf.mxu0
        %v1017 = vpop.f32.mrf.mxu0
        %v1018 = vadd.f32 0.0, %v1017
        %v1019 = vpop.f32.mrf.mxu0
        %1020 = vmatprep.mubr.bf16.mxu0 %v621
        %1021 = vmatmul.mubr.bf16.gmra.mxu0 %v620
        %v1022 = vpop.f32.mrf.mxu0
        %v1023 = vadd.f32 0.0, %v1022
        %v1024 = vpop.f32.mrf.mxu0
        %v1025 = vpop.f32.mrf.mxu0
        %v1026 = vadd.f32 0.0, %v1025
        %v1027 = vpop.f32.mrf.mxu0
        %1028 = vmatprep.mubr.bf16.mxu0 %v623
        %1029 = vmatmul.mubr.bf16.gmra.mxu0 %v622
        %v1030 = vpop.f32.mrf.mxu0
        %v1031 = vadd.f32 0.0, %v1030
        %v1032 = vpop.f32.mrf.mxu0
        %v1033 = vpop.f32.mrf.mxu0
        %v1034 = vadd.f32 0.0, %v1033
        %v1035 = vpop.f32.mrf.mxu0
        %1036 = vmatprep.mubr.bf16.mxu0 %v625
        %1037 = vmatmul.mubr.bf16.gmra.mxu0 %v624
        %v1038 = vpop.f32.mrf.mxu0
        %v1039 = vadd.f32 0.0, %v1038
        %v1040 = vpop.f32.mrf.mxu0
        %v1041 = vpop.f32.mrf.mxu0
        %v1042 = vadd.f32 0.0, %v1041
        %v1043 = vpop.f32.mrf.mxu0
        %1044 = vmatprep.mubr.bf16.mxu0 %v627
        %1045 = vmatmul.mubr.bf16.gmra.mxu0 %v626
        %v1046 = vpop.f32.mrf.mxu0
        %v1047 = vadd.f32 0.0, %v1046
        %v1048 = vpop.f32.mrf.mxu0
        %v1049 = vpop.f32.mrf.mxu0
        %v1050 = vadd.f32 0.0, %v1049
        %v1051 = vpop.f32.mrf.mxu0
        %1052 = vmatprep.mubr.bf16.mxu0 %v629
        %1053 = vmatmul.mubr.bf16.gmra.mxu0 %v628
        %v1054 = vpop.f32.mrf.mxu0
        %v1055 = vadd.f32 0.0, %v1054
        %v1056 = vpop.f32.mrf.mxu0
        %v1057 = vpop.f32.mrf.mxu0
        %v1058 = vadd.f32 0.0, %v1057
        %v1059 = vpop.f32.mrf.mxu0
        %1060 = vmatprep.mubr.bf16.mxu0 %v631
        %1061 = vmatmul.mubr.bf16.gmra.mxu0 %v630
        %v1062 = vpop.f32.mrf.mxu0
        %v1063 = vadd.f32 0.0, %v1062
        %v1064 = vpop.f32.mrf.mxu0
        %v1065 = vpop.f32.mrf.mxu0
        %v1066 = vadd.f32 0.0, %v1065
        %v1067 = vpop.f32.mrf.mxu0
        %1068 = vmatprep.mubr.bf16.mxu0 %v633
        %1069 = vmatmul.mubr.bf16.gmra.mxu0 %v632
        %v1070 = vpop.f32.mrf.mxu0
        %v1071 = vadd.f32 0.0, %v1070
        %v1072 = vpop.f32.mrf.mxu0
        %v1073 = vpop.f32.mrf.mxu0
        %v1074 = vadd.f32 0.0, %v1073
        %v1075 = vpop.f32.mrf.mxu0
        %1076 = vmatprep.mubr.bf16.mxu0 %v635
        %1077 = vmatmul.mubr.bf16.gmra.mxu0 %v634
        %v1078 = vpop.f32.mrf.mxu0
        %v1079 = vadd.f32 0.0, %v1078
        %v1080 = vpop.f32.mrf.mxu0
        %v1081 = vpop.f32.mrf.mxu0
        %v1082 = vadd.f32 0.0, %v1081
        %v1083 = vpop.f32.mrf.mxu0
        %1084 = vdwg.mxu0
        %v1085 = vmul.f32 %v831, %v831
        %v1086 = vmul.f32 %v834, %v834
        %v1087 = vmul.f32 %v839, %v839
        %v1088 = vmul.f32 %v842, %v842
        %v1089 = vmul.f32 %v847, %v847
        %v1090 = vmul.f32 %v850, %v850
        %v1091 = vmul.f32 %v855, %v855
        %v1092 = vmul.f32 %v858, %v858
        %v1093 = vmul.f32 %v863, %v863
        %v1094 = vmul.f32 %v866, %v866
        %v1095 = vmul.f32 %v871, %v871
        %v1096 = vmul.f32 %v874, %v874
        %v1097 = vmul.f32 %v879, %v879
        %v1098 = vmul.f32 %v882, %v882
        %v1099 = vmul.f32 %v887, %v887
        %v1100 = vmul.f32 %v890, %v890
        %v1101 = vmul.f32 %v895, %v895
        %v1102 = vmul.f32 %v898, %v898
        %v1103 = vmul.f32 %v903, %v903
        %v1104 = vmul.f32 %v906, %v906
        %v1105 = vmul.f32 %v911, %v911
        %v1106 = vmul.f32 %v914, %v914
        %v1107 = vmul.f32 %v919, %v919
        %v1108 = vmul.f32 %v922, %v922
        %v1109 = vmul.f32 %v927, %v927
        %v1110 = vmul.f32 %v930, %v930
        %v1111 = vmul.f32 %v935, %v935
        %v1112 = vmul.f32 %v938, %v938
        %v1113 = vmul.f32 %v943, %v943
        %v1114 = vmul.f32 %v946, %v946
        %v1115 = vmul.f32 %v951, %v951
        %v1116 = vmul.f32 %v954, %v954
        %v1117 = vmul.f32 %v959, %v959
        %v1118 = vmul.f32 %v962, %v962
        %v1119 = vmul.f32 %v967, %v967
        %v1120 = vmul.f32 %v970, %v970
        %v1121 = vmul.f32 %v975, %v975
        %v1122 = vmul.f32 %v978, %v978
        %v1123 = vmul.f32 %v983, %v983
        %v1124 = vmul.f32 %v986, %v986
        %v1125 = vmul.f32 %v991, %v991
        %v1126 = vmul.f32 %v994, %v994
        %v1127 = vmul.f32 %v999, %v999
        %v1128 = vmul.f32 %v1002, %v1002
        %v1129 = vmul.f32 %v1007, %v1007
        %v1130 = vmul.f32 %v1010, %v1010
        %v1131 = vmul.f32 %v1015, %v1015
        %v1132 = vmul.f32 %v1018, %v1018
        %v1133 = vmul.f32 %v1023, %v1023
        %v1134 = vmul.f32 %v1026, %v1026
        %v1135 = vmul.f32 %v1031, %v1031
        %v1136 = vmul.f32 %v1034, %v1034
        %v1137 = vmul.f32 %v1039, %v1039
        %v1138 = vmul.f32 %v1042, %v1042
        %v1139 = vmul.f32 %v1047, %v1047
        %v1140 = vmul.f32 %v1050, %v1050
        %v1141 = vmul.f32 %v1055, %v1055
        %v1142 = vmul.f32 %v1058, %v1058
        %v1143 = vmul.f32 %v1063, %v1063
        %v1144 = vmul.f32 %v1066, %v1066
        %v1145 = vmul.f32 %v1071, %v1071
        %v1146 = vmul.f32 %v1074, %v1074
        %v1147 = vmul.f32 %v1079, %v1079
        %v1148 = vmul.f32 %v1082, %v1082
        %v1149 = vld [vmem:[%s258] sm:$0xff]
        %v1150 = vld [vmem:[%s258 + $0x8] sm:$0xff]
        %v1151 = vld [vmem:[%s258 + $0x10] sm:$0xff]
        %v1152 = vld [vmem:[%s258 + $0x18] sm:$0xff]
        %v1153 = vld [vmem:[%s258 + $0x20] sm:$0xff]
        %v1154 = vld [vmem:[%s258 + $0x28] sm:$0xff]
        %v1155 = vld [vmem:[%s258 + $0x30] sm:$0xff]
        %v1156 = vld [vmem:[%s258 + $0x38] sm:$0xff]
        %v1157 = vld [vmem:[%s258 + $0x40] sm:$0xff]
        %v1158 = vld [vmem:[%s258 + $0x48] sm:$0xff]
        %v1159 = vld [vmem:[%s258 + $0x50] sm:$0xff]
        %v1160 = vld [vmem:[%s258 + $0x58] sm:$0xff]
        %v1161 = vld [vmem:[%s258 + $0x60] sm:$0xff]
        %v1162 = vld [vmem:[%s258 + $0x68] sm:$0xff]
        %v1163 = vld [vmem:[%s258 + $0x70] sm:$0xff]
        %v1164 = vld [vmem:[%s258 + $0x78] sm:$0xff]
        %v1165 = vld [vmem:[%s231] sm:$0xff]
        %v1166 = vld [vmem:[%s231 + $0x8] sm:$0xff]
        %v1167 = vld [vmem:[%s231 + $0x10] sm:$0xff]
        %v1168 = vld [vmem:[%s231 + $0x18] sm:$0xff]
        %v1169 = vld [vmem:[%s231 + $0x20] sm:$0xff]
        %v1170 = vld [vmem:[%s231 + $0x28] sm:$0xff]
        %v1171 = vld [vmem:[%s231 + $0x30] sm:$0xff]
        %v1172 = vld [vmem:[%s231 + $0x38] sm:$0xff]
        %v1173 = vld [vmem:[%s231 + $0x40] sm:$0xff]
        %v1174 = vld [vmem:[%s231 + $0x48] sm:$0xff]
        %v1175 = vld [vmem:[%s231 + $0x50] sm:$0xff]
        %v1176 = vld [vmem:[%s231 + $0x58] sm:$0xff]
        %v1177 = vld [vmem:[%s231 + $0x60] sm:$0xff]
        %v1178 = vld [vmem:[%s231 + $0x68] sm:$0xff]
        %v1179 = vld [vmem:[%s231 + $0x70] sm:$0xff]
        %v1180 = vld [vmem:[%s231 + $0x78] sm:$0xff]
        %v1181 = vld [vmem:[%s231 + $0x80] sm:$0xff]
        %v1182 = vld [vmem:[%s231 + $0x88] sm:$0xff]
        %v1183 = vld [vmem:[%s231 + $0x90] sm:$0xff]
        %v1184 = vld [vmem:[%s231 + $0x98] sm:$0xff]
        %v1185 = vld [vmem:[%s231 + $0xa0] sm:$0xff]
        %v1186 = vld [vmem:[%s231 + $0xa8] sm:$0xff]
        %v1187 = vld [vmem:[%s231 + $0xb0] sm:$0xff]
        %v1188 = vld [vmem:[%s231 + $0xb8] sm:$0xff]
        %v1189 = vld [vmem:[%s231 + $0xc0] sm:$0xff]
        %v1190 = vld [vmem:[%s231 + $0xc8] sm:$0xff]
        %v1191 = vld [vmem:[%s231 + $0xd0] sm:$0xff]
        %v1192 = vld [vmem:[%s231 + $0xd8] sm:$0xff]
        %v1193 = vld [vmem:[%s231 + $0xe0] sm:$0xff]
        %v1194 = vld [vmem:[%s231 + $0xe8] sm:$0xff]
        %v1195 = vld [vmem:[%s231 + $0xf0] sm:$0xff]
        %v1196 = vld [vmem:[%s231 + $0xf8] sm:$0xff]
        %v1197 = vld [vmem:[%s231 + $0x100] sm:$0xff]
        %v1198 = vld [vmem:[%s231 + $0x108] sm:$0xff]
        %v1199 = vld [vmem:[%s231 + $0x110] sm:$0xff]
        %v1200 = vld [vmem:[%s231 + $0x118] sm:$0xff]
        %v1201 = vld [vmem:[%s231 + $0x120] sm:$0xff]
        %v1202 = vld [vmem:[%s231 + $0x128] sm:$0xff]
        %v1203 = vld [vmem:[%s231 + $0x130] sm:$0xff]
        %v1204 = vld [vmem:[%s231 + $0x138] sm:$0xff]
        %v1205 = vld [vmem:[%s231 + $0x140] sm:$0xff]
        %v1206 = vld [vmem:[%s231 + $0x148] sm:$0xff]
        %v1207 = vld [vmem:[%s231 + $0x150] sm:$0xff]
        %v1208 = vld [vmem:[%s231 + $0x158] sm:$0xff]
        %v1209 = vld [vmem:[%s231 + $0x160] sm:$0xff]
        %v1210 = vld [vmem:[%s231 + $0x168] sm:$0xff]
        %v1211 = vld [vmem:[%s231 + $0x170] sm:$0xff]
        %v1212 = vld [vmem:[%s231 + $0x178] sm:$0xff]
        %v1213 = vld [vmem:[%s231 + $0x180] sm:$0xff]
        %v1214 = vld [vmem:[%s231 + $0x188] sm:$0xff]
        %v1215 = vld [vmem:[%s231 + $0x190] sm:$0xff]
        %v1216 = vld [vmem:[%s231 + $0x198] sm:$0xff]
        %v1217 = vld [vmem:[%s231 + $0x1a0] sm:$0xff]
        %v1218 = vld [vmem:[%s231 + $0x1a8] sm:$0xff]
        %v1219 = vld [vmem:[%s231 + $0x1b0] sm:$0xff]
        %v1220 = vld [vmem:[%s231 + $0x1b8] sm:$0xff]
        %v1221 = vld [vmem:[%s231 + $0x1c0] sm:$0xff]
        %v1222 = vld [vmem:[%s231 + $0x1c8] sm:$0xff]
        %v1223 = vld [vmem:[%s231 + $0x1d0] sm:$0xff]
        %v1224 = vld [vmem:[%s231 + $0x1d8] sm:$0xff]
        %v1225 = vld [vmem:[%s231 + $0x1e0] sm:$0xff]
        %v1226 = vld [vmem:[%s231 + $0x1e8] sm:$0xff]
        %v1227 = vld [vmem:[%s231 + $0x1f0] sm:$0xff]
        %v1228 = vld [vmem:[%s231 + $0x1f8] sm:$0xff]
        %1229 = vmatprep.subr.mxu0 0.0
        %1230 = vmatpush1.msra.mxu0 %v1100
        %1231 = vmatprep.subr.mxu0 0.0
        %1232 = vmatpush1.msra.mxu0 %v1099
        %1233 = vmatprep.subr.mxu0 0.0
        %1234 = vmatpush1.msra.mxu0 %v1098
        %1235 = vmatprep.subr.mxu0 0.0
        %1236 = vmatpush1.msra.mxu0 %v1097
        %1237 = vmatprep.subr.mxu0 0.0
        %1238 = vmatpush1.msra.mxu0 %v1096
        %1239 = vmatprep.subr.mxu0 0.0
        %1240 = vmatpush1.msra.mxu0 %v1095
        %1241 = vmatprep.subr.mxu0 0.0
        %1242 = vmatpush1.msra.mxu0 %v1094
        %1243 = vmatprep.subr.mxu0 0.0
        %1244 = vmatpush1.msra.mxu0 %v1093
        %1245 = vmatprep.subr.mxu0 0.0
        %1246 = vmatpush1.msra.mxu0 %v1092
        %1247 = vmatprep.subr.mxu0 0.0
        %1248 = vmatpush1.msra.mxu0 %v1091
        %1249 = vmatprep.subr.mxu0 0.0
        %1250 = vmatpush1.msra.mxu0 %v1090
        %1251 = vmatprep.subr.mxu0 0.0
        %1252 = vmatpush1.msra.mxu0 %v1089
        %1253 = vmatprep.subr.mxu0 0.0
        %1254 = vmatpush1.msra.mxu0 %v1088
        %1255 = vmatprep.subr.mxu0 0.0
        %1256 = vmatpush1.msra.mxu0 %v1087
        %1257 = vmatprep.subr.mxu0 0.0
        %1258 = vmatpush1.msra.mxu0 %v1086
        %1259 = vmatprep.subr.mxu0 0.0
        %1260 = vmatpush1.msra.mxu0 %v1085
        %1261 = vmatprep.subr.mxu0 0.0
        %1262 = vmatpush2.msra.mxu0 %v1116
        %1263 = vmatprep.subr.mxu0 0.0
        %1264 = vmatpush2.msra.mxu0 %v1115
        %1265 = vmatprep.subr.mxu0 0.0
        %1266 = vmatpush2.msra.mxu0 %v1114
        %1267 = vmatprep.subr.mxu0 0.0
        %1268 = vmatpush2.msra.mxu0 %v1113
        %1269 = vmatprep.subr.mxu0 0.0
        %1270 = vmatpush2.msra.mxu0 %v1112
        %1271 = vmatprep.subr.mxu0 0.0
        %1272 = vmatpush2.msra.mxu0 %v1111
        %1273 = vmatprep.subr.mxu0 0.0
        %1274 = vmatpush2.msra.mxu0 %v1110
        %1275 = vmatprep.subr.mxu0 0.0
        %1276 = vmatpush2.msra.mxu0 %v1109
        %1277 = vmatprep.subr.mxu0 0.0
        %1278 = vmatpush2.msra.mxu0 %v1108
        %1279 = vmatprep.subr.mxu0 0.0
        %1280 = vmatpush2.msra.mxu0 %v1107
        %1281 = vmatprep.subr.mxu0 0.0
        %1282 = vmatpush2.msra.mxu0 %v1106
        %1283 = vmatprep.subr.mxu0 0.0
        %1284 = vmatpush2.msra.mxu0 %v1105
        %1285 = vmatprep.subr.mxu0 0.0
        %1286 = vmatpush2.msra.mxu0 %v1104
        %1287 = vmatprep.subr.mxu0 0.0
        %1288 = vmatpush2.msra.mxu0 %v1103
        %1289 = vmatprep.subr.mxu0 0.0
        %1290 = vmatpush2.msra.mxu0 %v1102
        %1291 = vmatprep.subr.mxu0 0.0
        %1292 = vmatpush2.msra.mxu0 %v1101
        %1293 = vmatprep.mubr.f32.mxu0 %v1166
        %1294 = vmatmul.mubr.f32.gmra.mxu0 %v1165
        %v1295 = vpop.f32.mrf.mxu0
        %v1296 = vadd.f32 0.0, %v1295
        %v1297 = vpop.f32.mrf.mxu0
        %1298 = vmatprep.mubr.f32.mxu0 %v1170
        %1299 = vmatmul.mubr.f32.gmra.mxu0 %v1169
        %v1300 = vpop.f32.mrf.mxu0
        %v1301 = vadd.f32 0.0, %v1300
        %v1302 = vpop.f32.mrf.mxu0
        %1303 = vmatprep.mubr.f32.mxu0 %v1174
        %1304 = vmatmul.mubr.f32.gmra.mxu0 %v1173
        %v1305 = vpop.f32.mrf.mxu0
        %v1306 = vadd.f32 0.0, %v1305
        %v1307 = vpop.f32.mrf.mxu0
        %1308 = vmatprep.mubr.f32.mxu0 %v1178
        %1309 = vmatmul.mubr.f32.gmra.mxu0 %v1177
        %v1310 = vpop.f32.mrf.mxu0
        %v1311 = vadd.f32 0.0, %v1310
        %v1312 = vpop.f32.mrf.mxu0
        %1313 = vmatprep.mubr.f32.mxu0 %v1182
        %1314 = vmatmul.mubr.f32.gmra.mxu0 %v1181
        %v1315 = vpop.f32.mrf.mxu0
        %v1316 = vadd.f32 0.0, %v1315
        %v1317 = vpop.f32.mrf.mxu0
        %1318 = vmatprep.mubr.f32.mxu0 %v1186
        %1319 = vmatmul.mubr.f32.gmra.mxu0 %v1185
        %v1320 = vpop.f32.mrf.mxu0
        %v1321 = vadd.f32 0.0, %v1320
        %v1322 = vpop.f32.mrf.mxu0
        %1323 = vmatprep.mubr.f32.mxu0 %v1190
        %1324 = vmatmul.mubr.f32.gmra.mxu0 %v1189
        %v1325 = vpop.f32.mrf.mxu0
        %v1326 = vadd.f32 0.0, %v1325
        %v1327 = vpop.f32.mrf.mxu0
        %1328 = vmatprep.mubr.f32.mxu0 %v1194
        %1329 = vmatmul.mubr.f32.gmra.mxu0 %v1193
        %v1330 = vpop.f32.mrf.mxu0
        %v1331 = vadd.f32 0.0, %v1330
        %v1332 = vpop.f32.mrf.mxu0
        %1333 = vmatprep.mubr.f32.mxu0 %v1198
        %1334 = vmatmul.mubr.f32.gmra.mxu0 %v1197
        %v1335 = vpop.f32.mrf.mxu0
        %v1336 = vadd.f32 0.0, %v1335
        %v1337 = vpop.f32.mrf.mxu0
        %1338 = vmatprep.mubr.f32.mxu0 %v1202
        %1339 = vmatmul.mubr.f32.gmra.mxu0 %v1201
        %v1340 = vpop.f32.mrf.mxu0
        %v1341 = vadd.f32 0.0, %v1340
        %v1342 = vpop.f32.mrf.mxu0
        %1343 = vmatprep.mubr.f32.mxu0 %v1206
        %1344 = vmatmul.mubr.f32.gmra.mxu0 %v1205
        %v1345 = vpop.f32.mrf.mxu0
        %v1346 = vadd.f32 0.0, %v1345
        %v1347 = vpop.f32.mrf.mxu0
        %1348 = vmatprep.mubr.f32.mxu0 %v1210
        %1349 = vmatmul.mubr.f32.gmra.mxu0 %v1209
        %v1350 = vpop.f32.mrf.mxu0
        %v1351 = vadd.f32 0.0, %v1350
        %v1352 = vpop.f32.mrf.mxu0
        %1353 = vmatprep.mubr.f32.mxu0 %v1214
        %1354 = vmatmul.mubr.f32.gmra.mxu0 %v1213
        %v1355 = vpop.f32.mrf.mxu0
        %v1356 = vadd.f32 0.0, %v1355
        %v1357 = vpop.f32.mrf.mxu0
        %1358 = vmatprep.mubr.f32.mxu0 %v1218
        %1359 = vmatmul.mubr.f32.gmra.mxu0 %v1217
        %v1360 = vpop.f32.mrf.mxu0
        %v1361 = vadd.f32 0.0, %v1360
        %v1362 = vpop.f32.mrf.mxu0
        %1363 = vmatprep.mubr.f32.mxu0 %v1222
        %1364 = vmatmul.mubr.f32.gmra.mxu0 %v1221
        %v1365 = vpop.f32.mrf.mxu0
        %v1366 = vadd.f32 0.0, %v1365
        %v1367 = vpop.f32.mrf.mxu0
        %1368 = vmatprep.mubr.f32.mxu0 %v1226
        %1369 = vmatmul.mubr.f32.gmra.mxu0 %v1225
        %v1370 = vpop.f32.mrf.mxu0
        %v1371 = vadd.f32 0.0, %v1370
        %v1372 = vpop.f32.mrf.mxu0
        %1373 = vdwg.mxu0
        %1374 = vmatprep.subr.mxu0 0.0
        %1375 = vmatpush1.msra.mxu0 %v1132
        %1376 = vmatprep.subr.mxu0 0.0
        %1377 = vmatpush1.msra.mxu0 %v1131
        %1378 = vmatprep.subr.mxu0 0.0
        %1379 = vmatpush1.msra.mxu0 %v1130
        %1380 = vmatprep.subr.mxu0 0.0
        %1381 = vmatpush1.msra.mxu0 %v1129
        %1382 = vmatprep.subr.mxu0 0.0
        %1383 = vmatpush1.msra.mxu0 %v1128
        %1384 = vmatprep.subr.mxu0 0.0
        %1385 = vmatpush1.msra.mxu0 %v1127
        %1386 = vmatprep.subr.mxu0 0.0
        %1387 = vmatpush1.msra.mxu0 %v1126
        %1388 = vmatprep.subr.mxu0 0.0
        %1389 = vmatpush1.msra.mxu0 %v1125
        %1390 = vmatprep.subr.mxu0 0.0
        %1391 = vmatpush1.msra.mxu0 %v1124
        %1392 = vmatprep.subr.mxu0 0.0
        %1393 = vmatpush1.msra.mxu0 %v1123
        %1394 = vmatprep.subr.mxu0 0.0
        %1395 = vmatpush1.msra.mxu0 %v1122
        %1396 = vmatprep.subr.mxu0 0.0
        %1397 = vmatpush1.msra.mxu0 %v1121
        %1398 = vmatprep.subr.mxu0 0.0
        %1399 = vmatpush1.msra.mxu0 %v1120
        %1400 = vmatprep.subr.mxu0 0.0
        %1401 = vmatpush1.msra.mxu0 %v1119
        %1402 = vmatprep.subr.mxu0 0.0
        %1403 = vmatpush1.msra.mxu0 %v1118
        %1404 = vmatprep.subr.mxu0 0.0
        %1405 = vmatpush1.msra.mxu0 %v1117
        %1406 = vmatprep.subr.mxu0 0.0
        %1407 = vmatpush2.msra.mxu0 %v1148
        %1408 = vmatprep.subr.mxu0 0.0
        %1409 = vmatpush2.msra.mxu0 %v1147
        %1410 = vmatprep.subr.mxu0 0.0
        %1411 = vmatpush2.msra.mxu0 %v1146
        %1412 = vmatprep.subr.mxu0 0.0
        %1413 = vmatpush2.msra.mxu0 %v1145
        %1414 = vmatprep.subr.mxu0 0.0
        %1415 = vmatpush2.msra.mxu0 %v1144
        %1416 = vmatprep.subr.mxu0 0.0
        %1417 = vmatpush2.msra.mxu0 %v1143
        %1418 = vmatprep.subr.mxu0 0.0
        %1419 = vmatpush2.msra.mxu0 %v1142
        %1420 = vmatprep.subr.mxu0 0.0
        %1421 = vmatpush2.msra.mxu0 %v1141
        %1422 = vmatprep.subr.mxu0 0.0
        %1423 = vmatpush2.msra.mxu0 %v1140
        %1424 = vmatprep.subr.mxu0 0.0
        %1425 = vmatpush2.msra.mxu0 %v1139
        %1426 = vmatprep.subr.mxu0 0.0
        %1427 = vmatpush2.msra.mxu0 %v1138
        %1428 = vmatprep.subr.mxu0 0.0
        %1429 = vmatpush2.msra.mxu0 %v1137
        %1430 = vmatprep.subr.mxu0 0.0
        %1431 = vmatpush2.msra.mxu0 %v1136
        %1432 = vmatprep.subr.mxu0 0.0
        %1433 = vmatpush2.msra.mxu0 %v1135
        %1434 = vmatprep.subr.mxu0 0.0
        %1435 = vmatpush2.msra.mxu0 %v1134
        %1436 = vmatprep.subr.mxu0 0.0
        %1437 = vmatpush2.msra.mxu0 %v1133
        %1438 = vmatprep.mubr.f32.mxu0 %v1168
        %1439 = vmatmul.mubr.f32.gmra.mxu0 %v1167
        %v1440 = vpop.f32.mrf.mxu0
        %v1441 = vadd.f32 %v1296, %v1440
        %v1442 = vpop.f32.mrf.mxu0
        %1443 = vmatprep.mubr.f32.mxu0 %v1172
        %1444 = vmatmul.mubr.f32.gmra.mxu0 %v1171
        %v1445 = vpop.f32.mrf.mxu0
        %v1446 = vadd.f32 %v1301, %v1445
        %v1447 = vpop.f32.mrf.mxu0
        %1448 = vmatprep.mubr.f32.mxu0 %v1176
        %1449 = vmatmul.mubr.f32.gmra.mxu0 %v1175
        %v1450 = vpop.f32.mrf.mxu0
        %v1451 = vadd.f32 %v1306, %v1450
        %v1452 = vpop.f32.mrf.mxu0
        %1453 = vmatprep.mubr.f32.mxu0 %v1180
        %1454 = vmatmul.mubr.f32.gmra.mxu0 %v1179
        %v1455 = vpop.f32.mrf.mxu0
        %v1456 = vadd.f32 %v1311, %v1455
        %v1457 = vpop.f32.mrf.mxu0
        %1458 = vmatprep.mubr.f32.mxu0 %v1184
        %1459 = vmatmul.mubr.f32.gmra.mxu0 %v1183
        %v1460 = vpop.f32.mrf.mxu0
        %v1461 = vadd.f32 %v1316, %v1460
        %v1462 = vpop.f32.mrf.mxu0
        %1463 = vmatprep.mubr.f32.mxu0 %v1188
        %1464 = vmatmul.mubr.f32.gmra.mxu0 %v1187
        %v1465 = vpop.f32.mrf.mxu0
        %v1466 = vadd.f32 %v1321, %v1465
        %v1467 = vpop.f32.mrf.mxu0
        %1468 = vmatprep.mubr.f32.mxu0 %v1192
        %1469 = vmatmul.mubr.f32.gmra.mxu0 %v1191
        %v1470 = vpop.f32.mrf.mxu0
        %v1471 = vadd.f32 %v1326, %v1470
        %v1472 = vpop.f32.mrf.mxu0
        %1473 = vmatprep.mubr.f32.mxu0 %v1196
        %1474 = vmatmul.mubr.f32.gmra.mxu0 %v1195
        %v1475 = vpop.f32.mrf.mxu0
        %v1476 = vadd.f32 %v1331, %v1475
        %v1477 = vpop.f32.mrf.mxu0
        %1478 = vmatprep.mubr.f32.mxu0 %v1200
        %1479 = vmatmul.mubr.f32.gmra.mxu0 %v1199
        %v1480 = vpop.f32.mrf.mxu0
        %v1481 = vadd.f32 %v1336, %v1480
        %v1482 = vpop.f32.mrf.mxu0
        %1483 = vmatprep.mubr.f32.mxu0 %v1204
        %1484 = vmatmul.mubr.f32.gmra.mxu0 %v1203
        %v1485 = vpop.f32.mrf.mxu0
        %v1486 = vadd.f32 %v1341, %v1485
        %v1487 = vpop.f32.mrf.mxu0
        %1488 = vmatprep.mubr.f32.mxu0 %v1208
        %1489 = vmatmul.mubr.f32.gmra.mxu0 %v1207
        %v1490 = vpop.f32.mrf.mxu0
        %v1491 = vadd.f32 %v1346, %v1490
        %v1492 = vpop.f32.mrf.mxu0
        %1493 = vmatprep.mubr.f32.mxu0 %v1212
        %1494 = vmatmul.mubr.f32.gmra.mxu0 %v1211
        %v1495 = vpop.f32.mrf.mxu0
        %v1496 = vadd.f32 %v1351, %v1495
        %v1497 = vpop.f32.mrf.mxu0
        %1498 = vmatprep.mubr.f32.mxu0 %v1216
        %1499 = vmatmul.mubr.f32.gmra.mxu0 %v1215
        %v1500 = vpop.f32.mrf.mxu0
        %v1501 = vadd.f32 %v1356, %v1500
        %v1502 = vpop.f32.mrf.mxu0
        %1503 = vmatprep.mubr.f32.mxu0 %v1220
        %1504 = vmatmul.mubr.f32.gmra.mxu0 %v1219
        %v1505 = vpop.f32.mrf.mxu0
        %v1506 = vadd.f32 %v1361, %v1505
        %v1507 = vpop.f32.mrf.mxu0
        %1508 = vmatprep.mubr.f32.mxu0 %v1224
        %1509 = vmatmul.mubr.f32.gmra.mxu0 %v1223
        %v1510 = vpop.f32.mrf.mxu0
        %v1511 = vadd.f32 %v1366, %v1510
        %v1512 = vpop.f32.mrf.mxu0
        %1513 = vmatprep.mubr.f32.mxu0 %v1228
        %1514 = vmatmul.mubr.f32.gmra.mxu0 %v1227
        %v1515 = vpop.f32.mrf.mxu0
        %v1516 = vadd.f32 %v1371, %v1515
        %v1517 = vpop.f32.mrf.mxu0
        %1518 = vdwg.mxu0
        %v1519 = vadd.f32 %v1149, %v1441
        %v1520 = vadd.f32 %v1150, %v1446
        %v1521 = vadd.f32 %v1151, %v1451
        %v1522 = vadd.f32 %v1152, %v1456
        %v1523 = vadd.f32 %v1153, %v1461
        %v1524 = vadd.f32 %v1154, %v1466
        %v1525 = vadd.f32 %v1155, %v1471
        %v1526 = vadd.f32 %v1156, %v1476
        %v1527 = vadd.f32 %v1157, %v1481
        %v1528 = vadd.f32 %v1158, %v1486
        %v1529 = vadd.f32 %v1159, %v1491
        %v1530 = vadd.f32 %v1160, %v1496
        %v1531 = vadd.f32 %v1161, %v1501
        %v1532 = vadd.f32 %v1162, %v1506
        %v1533 = vadd.f32 %v1163, %v1511
        %v1534 = vadd.f32 %v1164, %v1516
        %1535 = vst [vmem:[%s258] sm:$0xff] %v1519
        %1536 = vst [vmem:[%s258 + $0x8] sm:$0xff] %v1520
        %1537 = vst [vmem:[%s258 + $0x10] sm:$0xff] %v1521
        %1538 = vst [vmem:[%s258 + $0x18] sm:$0xff] %v1522
        %1539 = vst [vmem:[%s258 + $0x20] sm:$0xff] %v1523
        %1540 = vst [vmem:[%s258 + $0x28] sm:$0xff] %v1524
        %1541 = vst [vmem:[%s258 + $0x30] sm:$0xff] %v1525
        %1542 = vst [vmem:[%s258 + $0x38] sm:$0xff] %v1526
        %1543 = vst [vmem:[%s258 + $0x40] sm:$0xff] %v1527
        %1544 = vst [vmem:[%s258 + $0x48] sm:$0xff] %v1528
        %1545 = vst [vmem:[%s258 + $0x50] sm:$0xff] %v1529
        %1546 = vst [vmem:[%s258 + $0x58] sm:$0xff] %v1530
        %1547 = vst [vmem:[%s258 + $0x60] sm:$0xff] %v1531
        %1548 = vst [vmem:[%s258 + $0x68] sm:$0xff] %v1532
        %1549 = vst [vmem:[%s258 + $0x70] sm:$0xff] %v1533
        %1550 = vst [vmem:[%s258 + $0x78] sm:$0xff] %v1534
        %p1551 = scmp.eq.s32.totalorder %s26, 1
        // Predicated region
        $region49: #{tpu_custom_call.1} parent=31 // pred_check
          %p1552 = pneg %p1551
        $region50: #{tpu_custom_call.1} parent=31 // pred_check_branch
          %1554 = sbr.rel (%p1552) target = $region52
        $region51: #{tpu_custom_call.1} parent=31 // pred_region
          %v1555 = vld [vmem:[%s258] sm:$0xff]
          %v1556 = vld [vmem:[%s258 + $0x8] sm:$0xff]
          %v1557 = vld [vmem:[%s258 + $0x10] sm:$0xff]
          %v1558 = vld [vmem:[%s258 + $0x18] sm:$0xff]
          %v1559 = vld [vmem:[%s258 + $0x20] sm:$0xff]
          %v1560 = vld [vmem:[%s258 + $0x28] sm:$0xff]
          %v1561 = vld [vmem:[%s258 + $0x30] sm:$0xff]
          %v1562 = vld [vmem:[%s258 + $0x38] sm:$0xff]
          %v1563 = vld [vmem:[%s258 + $0x40] sm:$0xff]
          %v1564 = vld [vmem:[%s258 + $0x48] sm:$0xff]
          %v1565 = vld [vmem:[%s258 + $0x50] sm:$0xff]
          %v1566 = vld [vmem:[%s258 + $0x58] sm:$0xff]
          %v1567 = vld [vmem:[%s258 + $0x60] sm:$0xff]
          %v1568 = vld [vmem:[%s258 + $0x68] sm:$0xff]
          %v1569 = vld [vmem:[%s258 + $0x70] sm:$0xff]
          %v1570 = vld [vmem:[%s258 + $0x78] sm:$0xff]
          %v1571 = vtanh.pop %v1555
          %v1572 = vtanh.pop %v1556
          %v1573 = vtanh.pop %v1557
          %v1574 = vtanh.pop %v1558
          %v1575 = vtanh.pop %v1559
          %v1576 = vtanh.pop %v1560
          %v1577 = vtanh.pop %v1561
          %v1578 = vtanh.pop %v1562
          %v1579 = vtanh.pop %v1563
          %v1580 = vtanh.pop %v1564
          %v1581 = vtanh.pop %v1565
          %v1582 = vtanh.pop %v1566
          %v1583 = vtanh.pop %v1567
          %v1584 = vtanh.pop %v1568
          %v1585 = vtanh.pop %v1569
          %v1586 = vtanh.pop %v1570
          %1587 = vst [vmem:[%s258] sm:$0xff] %v1571
          %1588 = vst [vmem:[%s258 + $0x8] sm:$0xff] %v1572
          %1589 = vst [vmem:[%s258 + $0x10] sm:$0xff] %v1573
          %1590 = vst [vmem:[%s258 + $0x18] sm:$0xff] %v1574
          %1591 = vst [vmem:[%s258 + $0x20] sm:$0xff] %v1575
          %1592 = vst [vmem:[%s258 + $0x28] sm:$0xff] %v1576
          %1593 = vst [vmem:[%s258 + $0x30] sm:$0xff] %v1577
          %1594 = vst [vmem:[%s258 + $0x38] sm:$0xff] %v1578
          %1595 = vst [vmem:[%s258 + $0x40] sm:$0xff] %v1579
          %1596 = vst [vmem:[%s258 + $0x48] sm:$0xff] %v1580
          %1597 = vst [vmem:[%s258 + $0x50] sm:$0xff] %v1581
          %1598 = vst [vmem:[%s258 + $0x58] sm:$0xff] %v1582
          %1599 = vst [vmem:[%s258 + $0x60] sm:$0xff] %v1583
          %1600 = vst [vmem:[%s258 + $0x68] sm:$0xff] %v1584
          %1601 = vst [vmem:[%s258 + $0x70] sm:$0xff] %v1585
          %1602 = vst [vmem:[%s258 + $0x78] sm:$0xff] %v1586
        $region52: #{tpu_custom_call.1} parent=31 // pred_fallthru
          _
        %s1603 = sand.u32 %s116, 1
        %s1604 = scalar_lea.sflag [#allocation4], %s1603
        %s1605 = sand.u32 %s116, 1
        %s1606 = smul.addr %s1605, 128
        %s1607 = scalar_lea.vmem [#allocation8], %s1606
        // Predicated region
        $region53: #{tpu_custom_call.1} parent=31 // pred_check
          %p1608 = pneg %p126
        $region54: #{tpu_custom_call.1} parent=31 // pred_check_branch
          %1610 = sbr.rel (%p1608) target = $region56
        $region55: #{tpu_custom_call.1} parent=31 // pred_region
          %s1611 = smul.u32 16, %s25
          %s1613 = ssub.s32 2048, 2048
          %1614 = vsyncadd %s1604, %s1613
          %s1615 = smul.addr %s1611, 128
          %s1616 = scalar_lea.hbm %s3, %s1615
          %s1617 = sshll.u32 %s1607, 4
          %s1618 = int_to_ptr.vmem [resolvable:$true] %s1617
          %1623 = dma.vmem_to_hbm [thread:$0]  %s1618, 2048, %s1616, %s1604, 128, 128, 8
        $region56: #{tpu_custom_call.1} parent=31 // pred_fallthru
          _
      $region32: #{tpu_custom_call.1} parent=5 // pred_fallthru
        _
      %p1624 = scmp.le.s32.totalorder 2, %s16
      // Predicated region
      $region57: #{tpu_custom_call.1} parent=5 // pred_check
        %p1625 = pneg %p1624
      $region58: #{tpu_custom_call.1} parent=5 // pred_check_branch
        %1627 = sbr.rel (%p1625) target = $region60
      $region59: #{tpu_custom_call.1} parent=5 // pred_region
        %s1628 = ssub.s32 %s16, 2
        // Predicated region
        $region61: #{tpu_custom_call.1} parent=59 // pred_check
          %p1629 = pneg %p132
        $region62: #{tpu_custom_call.1} parent=59 // pred_check_branch
          %1631 = sbr.rel (%p1629) target = $region64
        $region63: #{tpu_custom_call.1} parent=59 // pred_region
          %s1632 = sand.u32 %s117, 1
          %s1633 = scalar_lea.sflag [#allocation4], %s1632
          %s1634 = sand.u32 %s117, 1
          %s1635 = smul.addr %s1634, 128
          %s1636 = scalar_lea.vmem [#allocation8], %s1635
          %1637 = dma.done %s1633, 2048
        $region64: #{tpu_custom_call.1} parent=59 // pred_fallthru
          _
      $region60: #{tpu_custom_call.1} parent=5 // pred_fallthru
        _
    $region6: #{tpu_custom_call.1} parent=1 // loop_footer
      %s20 = sadd.s32 1, %s16
    $region7: #{tpu_custom_call.1} parent=1 // loop_footer_branch
      %15 = sbr.rel target = $region3
    $region8: #{tpu_custom_call.1} parent=1 // loop_exit
      _
    %1638 = vsyncpa [#allocation3], 1
    %s1639 = scalar_lea.sflag [#allocation3], 1
    %1640 = vsyncpa %s1639, 1
    %1641 = vsyncpa [#allocation6], 1
    %s1642 = scalar_lea.sflag [#allocation6], 1
    %1643 = vsyncpa %s1642, 1
    %1644 = vsyncpa [#allocation4], 1
    %s1645 = scalar_lea.sflag [#allocation4], 1
    %1646 = vsyncpa %s1645, 1

</llo_original>
